<compile_context>
chip_gen: v7x
topology: tpu7x:2x2x1
jax: 0.10.0
libtpu: 0.0.40
codegen_flags: <defaults>
</compile_context>

<pallas_src>
import jax
import jax.numpy as jnp
from jax.experimental import pallas as pl
from jax.experimental.pallas import tpu as pltpu


def _deconv_kernel(x_ref, cov_ref, w1_ref, b1_ref, g_ref, be_ref,
                   w2_ref, b2_ref, out_ref):
    x = x_ref[...]
    cov = cov_ref[...]
    # Hoist the (1, H)/(1, Cp) parameter loads once per tile.
    b1 = b1_ref[...]
    gamma = g_ref[...]
    beta = be_ref[...]
    b2 = b2_ref[...]

    # valid_mask = ~isnan(X); X = where(valid, X, 0); coverage *= valid_mask
    valid = jnp.logical_not(jnp.isnan(x))
    x = jnp.where(valid, x, jnp.zeros_like(x))
    cov = cov * valid.astype(cov.dtype)

    # X_weighted = X * log1p(coverage)
    xw = x * jnp.log1p(cov)

    # features: Linear(num_markers, 256) -- bf16 MXU inputs, f32 accumulate.
    h = jnp.dot(xw.astype(jnp.bfloat16), w1_ref[...],
                preferred_element_type=jnp.float32) + b1

    # LayerNorm(256), eps=1e-5, single reduction pass: var = E[h^2] - mu^2.
    mu = jnp.mean(h, axis=-1, keepdims=True)
    msq = jnp.mean(h * h, axis=-1, keepdims=True)
    var = jnp.maximum(msq - mu * mu, 0.0)
    inv = jax.lax.rsqrt(var + 1e-5)
    scale = gamma * inv              # (TB, H): gamma * inv_std folded
    shift = beta - mu * scale        # (TB, H)
    hn = h * scale + shift

    # ReLU; Dropout(0.2) is identity in eval mode.
    hr = jnp.maximum(hn, 0.0)

    # output: Linear(256, Cp) -- lane-dense (Cp multiple of 128).
    logits = jnp.dot(hr.astype(jnp.bfloat16), w2_ref[...],
                     preferred_element_type=jnp.float32) + b2

    # Softmax over the cell-type axis (padded classes have -1e30 bias -> 0).
    m = jnp.max(logits, axis=-1, keepdims=True)
    e = jnp.exp(logits - m)
    denom = jnp.sum(e, axis=-1, keepdims=True)
    out_ref[...] = (e * pl.reciprocal(denom, approx=True)).astype(out_ref.dtype)


def deconvolution_forward(X, coverage, params, *, tb=128):
    """X, coverage: (B, M) float32. Returns (B, C) softmax probabilities."""
    B, M = X.shape
    H = params["w1"].shape[1]
    C = params["w2"].shape[1]

    # Pad the class dimension to a lane-dense multiple of 128.
    c_pad = ((C + 127) // 128) * 128
    # Pad the batch to a multiple of the batch tile (padded rows discarded).
    b_pad = ((B + tb - 1) // tb) * tb

    if b_pad != B:
        X = jnp.pad(X, ((0, b_pad - B), (0, 0)))
        coverage = jnp.pad(coverage, ((0, b_pad - B), (0, 0)))

    w1 = params["w1"].astype(jnp.bfloat16)
    w2 = jnp.pad(params["w2"], ((0, 0), (0, c_pad - C))).astype(jnp.bfloat16)
    # -1e30 bias on padded classes: exp underflows to 0, mass stays on real C.
    b2 = jnp.pad(params["b2"], ((0, 0), (0, c_pad - C)),
                 constant_values=-1e30).astype(jnp.float32)

    x_spec = pl.BlockSpec((tb, M), lambda i: (i, 0))
    resident = lambda shape: pl.BlockSpec(shape, lambda i: (0, 0))

    out = pl.pallas_call(
        _deconv_kernel,
        out_shape=jax.ShapeDtypeStruct((b_pad, c_pad), jnp.float32),
        grid=(b_pad // tb,),
        in_specs=[
            x_spec,                 # X tile
            x_spec,                 # coverage tile
            resident((M, H)),       # W1 (bf16, VMEM-resident)
            resident((1, H)),       # b1
            resident((1, H)),       # gamma
            resident((1, H)),       # beta
            resident((H, c_pad)),   # W2 (bf16, VMEM-resident)
            resident((1, c_pad)),   # b2 (padded with -1e30)
        ],
        out_specs=pl.BlockSpec((tb, c_pad), lambda i: (i, 0)),
        compiler_params=pltpu.CompilerParams(
            dimension_semantics=("parallel",),
            vmem_limit_bytes=32 << 20),
    )(X, coverage, w1, params["b1"], params["gamma"], params["beta"], w2, b2)

    return out[:B, :C]


def init_params(key, num_markers, num_cell_types, hidden=256):
    k1, k2, k3, k4 = jax.random.split(key, 4)
    # Deterministic, PyTorch-Linear-like uniform init (synthetic weights).
    bound1 = 1.0 / jnp.sqrt(num_markers)
    bound2 = 1.0 / jnp.sqrt(hidden)
    return {
        "w1": jax.random.uniform(k1, (num_markers, hidden), jnp.float32,
                                 -bound1, bound1),
        "b1": jax.random.uniform(k2, (1, hidden), jnp.float32, -bound1, bound1),
        "gamma": jnp.ones((1, hidden), jnp.float32),
        "beta": jnp.zeros((1, hidden), jnp.float32),
        "w2": jax.random.uniform(k3, (hidden, num_cell_types), jnp.float32,
                                 -bound2, bound2),
        "b2": jax.random.uniform(k4, (1, num_cell_types), jnp.float32,
                                 -bound2, bound2),
    }


def _reference_forward(X, coverage, params):
    """Pure-JAX f32 reference (PyTorch semantics) for sanity checking."""
    valid = jnp.logical_not(jnp.isnan(X))
    x = jnp.where(valid, X, 0.0)
    cov = coverage * valid.astype(coverage.dtype)
    xw = x * jnp.log1p(cov)
    h = xw @ params["w1"] + params["b1"]
    mu = jnp.mean(h, axis=-1, keepdims=True)
    var = jnp.mean((h - mu) ** 2, axis=-1, keepdims=True)
    hn = (h - mu) * jax.lax.rsqrt(var + 1e-5) * params["gamma"] + params["beta"]
    hr = jnp.maximum(hn, 0.0)
    logits = hr @ params["w2"] + params["b2"]
    return jax.nn.softmax(logits, axis=1)


if __name__ == "__main__":
    B, M, C = 200, 32, 8  # batch (non-multiple of tile to exercise padding)

    key = jax.random.PRNGKey(0)
    kx, kc, kn, kp = jax.random.split(key, 4)

    X = jax.random.normal(kx, (B, M), jnp.float32)
    # Inject some NaNs so the valid-mask path is exercised.
    nan_mask = jax.random.bernoulli(kn, 0.15, (B, M))
    X = jnp.where(nan_mask, jnp.nan, X)
    coverage = jax.random.uniform(kc, (B, M), jnp.float32, 0.0, 100.0)

    params = init_params(kp, M, C)

    probs = deconvolution_forward(X, coverage, params)
    probs = jax.block_until_ready(probs)

    ref = _reference_forward(X, coverage, params)
    assert probs.shape == (B, C)
    # Loose tolerances account for bf16 MXU inputs + approx reciprocal.
    assert jnp.all(jnp.isfinite(probs))
    assert jnp.allclose(jnp.sum(probs, axis=1), 1.0, atol=5e-3)
    assert jnp.allclose(probs, ref, atol=3e-2, rtol=3e-2)

    print("KERNEL_OK")
</pallas_src>

<mosaic_0001>
module attributes {stable_mosaic.version = 11 : i64} {
  func.func @_deconv_kernel(%arg0: i32, %arg1: memref<128x32xf32, #tpu.memory_space<vmem>>, %arg2: memref<128x32xf32, #tpu.memory_space<vmem>>, %arg3: memref<32x256xbf16, #tpu.memory_space<vmem>>, %arg4: memref<1x256xf32, #tpu.memory_space<vmem>>, %arg5: memref<1x256xf32, #tpu.memory_space<vmem>>, %arg6: memref<1x256xf32, #tpu.memory_space<vmem>>, %arg7: memref<256x128xbf16, #tpu.memory_space<vmem>>, %arg8: memref<1x128xf32, #tpu.memory_space<vmem>>, %arg9: memref<128x128xf32, #tpu.memory_space<vmem>>) attributes {dimension_semantics = [#tpu.dimension_semantics<parallel>], iteration_bounds = array<i64: 2>, scalar_prefetch = 0 : i64, scratch_operands = 0 : i64, tpu.core_type = #tpu.core_type<tc>, window_params = [{transform_indices = @transform_0, window_bounds = array<i64: 128, 32>}, {transform_indices = @transform_1, window_bounds = array<i64: 128, 32>}, {pipeline_mode = #tpu.pipeline_mode<synchronous>, transform_indices = @transform_2, window_bounds = array<i64: 32, 256>}, {pipeline_mode = #tpu.pipeline_mode<synchronous>, transform_indices = @transform_3, window_bounds = array<i64: 1, 256>}, {pipeline_mode = #tpu.pipeline_mode<synchronous>, transform_indices = @transform_4, window_bounds = array<i64: 1, 256>}, {pipeline_mode = #tpu.pipeline_mode<synchronous>, transform_indices = @transform_5, window_bounds = array<i64: 1, 256>}, {pipeline_mode = #tpu.pipeline_mode<synchronous>, transform_indices = @transform_6, window_bounds = array<i64: 256, 128>}, {pipeline_mode = #tpu.pipeline_mode<synchronous>, transform_indices = @transform_7, window_bounds = array<i64: 1, 128>}, {transform_indices = @transform_8, window_bounds = array<i64: 128, 128>}]} {
    %c0 = arith.constant 0 : index
    %c0_0 = arith.constant 0 : index
    %0 = vector.load %arg1[%c0, %c0_0] : memref<128x32xf32, #tpu.memory_space<vmem>>, vector<128x32xf32>
    %c0_1 = arith.constant 0 : index
    %c0_2 = arith.constant 0 : index
    %1 = vector.load %arg2[%c0_1, %c0_2] : memref<128x32xf32, #tpu.memory_space<vmem>>, vector<128x32xf32>
    %c0_3 = arith.constant 0 : index
    %c0_4 = arith.constant 0 : index
    %2 = vector.load %arg4[%c0_3, %c0_4] : memref<1x256xf32, #tpu.memory_space<vmem>>, vector<1x256xf32>
    %c0_5 = arith.constant 0 : index
    %c0_6 = arith.constant 0 : index
    %3 = vector.load %arg5[%c0_5, %c0_6] : memref<1x256xf32, #tpu.memory_space<vmem>>, vector<1x256xf32>
    %c0_7 = arith.constant 0 : index
    %c0_8 = arith.constant 0 : index
    %4 = vector.load %arg6[%c0_7, %c0_8] : memref<1x256xf32, #tpu.memory_space<vmem>>, vector<1x256xf32>
    %c0_9 = arith.constant 0 : index
    %c0_10 = arith.constant 0 : index
    %5 = vector.load %arg8[%c0_9, %c0_10] : memref<1x128xf32, #tpu.memory_space<vmem>>, vector<1x128xf32>
    %6 = arith.cmpf one, %0, %0 : vector<128x32xf32>
    %cst = arith.constant dense<true> : vector<128x32xi1>
    %7 = arith.xori %6, %cst : vector<128x32xi1>
    %cst_11 = arith.constant 0.000000e+00 : f32
    %8 = vector.broadcast %cst_11 : f32 to vector<128x32xf32>
    %9 = arith.select %7, %0, %8 : vector<128x32xi1>, vector<128x32xf32>
    %10 = arith.extui %7 : vector<128x32xi1> to vector<128x32xi32>
    %11 = arith.sitofp %10 : vector<128x32xi32> to vector<128x32xf32>
    %12 = arith.mulf %1, %11 : vector<128x32xf32>
    %13 = math.log1p %12 : vector<128x32xf32>
    %14 = arith.mulf %9, %13 : vector<128x32xf32>
    %15 = arith.truncf %14 : vector<128x32xf32> to vector<128x32xbf16>
    %c0_12 = arith.constant 0 : index
    %c0_13 = arith.constant 0 : index
    %16 = vector.load %arg3[%c0_12, %c0_13] : memref<32x256xbf16, #tpu.memory_space<vmem>>, vector<32x256xbf16>
    %cst_14 = arith.constant dense<0.000000e+00> : vector<128x256xf32>
    %17 = tpu.matmul %15, %16, %cst_14 {dimension_numbers = #tpu.dot_dimension_numbers<[1], [0], [0], [1], [0, 0, 1, 1], [], []>} : vector<128x32xbf16>, vector<32x256xbf16>, vector<128x256xf32> -> vector<128x256xf32>
    %18 = vector.broadcast %2 : vector<1x256xf32> to vector<128x256xf32>
    %19 = arith.addf %17, %18 : vector<128x256xf32>
    %cst_15 = arith.constant dense<0.000000e+00> : vector<128xf32>
    %20 = vector.multi_reduction <add>, %19, %cst_15 [1] : vector<128x256xf32> to vector<128xf32>
    %21 = vector.shape_cast %20 : vector<128xf32> to vector<128x1xf32>
    %cst_16 = arith.constant 2.560000e+02 : f32
    %22 = vector.broadcast %cst_16 : f32 to vector<128x1xf32>
    %23 = arith.divf %21, %22 : vector<128x1xf32>
    %24 = arith.mulf %19, %19 : vector<128x256xf32>
    %cst_17 = arith.constant dense<0.000000e+00> : vector<128xf32>
    %25 = vector.multi_reduction <add>, %24, %cst_17 [1] : vector<128x256xf32> to vector<128xf32>
    %26 = vector.shape_cast %25 : vector<128xf32> to vector<128x1xf32>
    %cst_18 = arith.constant 2.560000e+02 : f32
    %27 = vector.broadcast %cst_18 : f32 to vector<128x1xf32>
    %28 = arith.divf %26, %27 : vector<128x1xf32>
    %29 = arith.mulf %23, %23 : vector<128x1xf32>
    %30 = arith.subf %28, %29 : vector<128x1xf32>
    %cst_19 = arith.constant 0.000000e+00 : f32
    %31 = vector.broadcast %cst_19 : f32 to vector<128x1xf32>
    %32 = arith.maximumf %30, %31 : vector<128x1xf32>
    %cst_20 = arith.constant 9.99999974E-6 : f32
    %33 = vector.broadcast %cst_20 : f32 to vector<128x1xf32>
    %34 = arith.addf %32, %33 : vector<128x1xf32>
    %35 = math.rsqrt %34 : vector<128x1xf32>
    %36 = vector.broadcast %3 : vector<1x256xf32> to vector<128x256xf32>
    %37 = vector.broadcast %35 : vector<128x1xf32> to vector<128x256xf32>
    %38 = arith.mulf %36, %37 : vector<128x256xf32>
    %39 = vector.broadcast %23 : vector<128x1xf32> to vector<128x256xf32>
    %40 = arith.mulf %39, %38 : vector<128x256xf32>
    %41 = vector.broadcast %4 : vector<1x256xf32> to vector<128x256xf32>
    %42 = arith.subf %41, %40 : vector<128x256xf32>
    %43 = arith.mulf %19, %38 : vector<128x256xf32>
    %44 = arith.addf %43, %42 : vector<128x256xf32>
    %cst_21 = arith.constant 0.000000e+00 : f32
    %45 = vector.broadcast %cst_21 : f32 to vector<128x256xf32>
    %46 = arith.maximumf %44, %45 : vector<128x256xf32>
    %47 = arith.truncf %46 : vector<128x256xf32> to vector<128x256xbf16>
    %c0_22 = arith.constant 0 : index
    %c0_23 = arith.constant 0 : index
    %48 = vector.load %arg7[%c0_22, %c0_23] : memref<256x128xbf16, #tpu.memory_space<vmem>>, vector<256x128xbf16>
    %cst_24 = arith.constant dense<0.000000e+00> : vector<128x128xf32>
    %49 = tpu.matmul %47, %48, %cst_24 {dimension_numbers = #tpu.dot_dimension_numbers<[1], [0], [0], [1], [0, 0, 1, 1], [], []>} : vector<128x256xbf16>, vector<256x128xbf16>, vector<128x128xf32> -> vector<128x128xf32>
    %50 = vector.broadcast %5 : vector<1x128xf32> to vector<128x128xf32>
    %51 = arith.addf %49, %50 : vector<128x128xf32>
    %cst_25 = arith.constant dense<0xFF800000> : vector<128xf32>
    %52 = vector.multi_reduction <maximumf>, %51, %cst_25 [1] : vector<128x128xf32> to vector<128xf32>
    %53 = vector.shape_cast %52 : vector<128xf32> to vector<128x1xf32>
    %54 = vector.broadcast %53 : vector<128x1xf32> to vector<128x128xf32>
    %55 = arith.subf %51, %54 : vector<128x128xf32>
    %56 = math.exp %55 : vector<128x128xf32>
    %cst_26 = arith.constant dense<0.000000e+00> : vector<128xf32>
    %57 = vector.multi_reduction <add>, %56, %cst_26 [1] : vector<128x128xf32> to vector<128xf32>
    %58 = vector.shape_cast %57 : vector<128xf32> to vector<128x1xf32>
    %59 = tpu.reciprocal %58 {approx = true} : vector<128x1xf32> -> vector<128x1xf32>
    %60 = vector.broadcast %59 : vector<128x1xf32> to vector<128x128xf32>
    %61 = arith.mulf %56, %60 : vector<128x128xf32>
    %c0_27 = arith.constant 0 : index
    %c0_28 = arith.constant 0 : index
    %62 = vector.load %arg9[%c0_27, %c0_28] : memref<128x128xf32, #tpu.memory_space<vmem>>, vector<128x128xf32>
    tpu.vector_store %arg9[%c0_27, %c0_28], %61 {strides = array<i32>} : memref<128x128xf32, #tpu.memory_space<vmem>>, vector<128x128xf32>,
    return
  }
  func.func @transform_0(%arg0: i32) -> (i32, i32) {
    %c0_i32 = arith.constant 0 : i32
    %c0_i32_0 = arith.constant 0 : i32
    return %arg0, %c0_i32 : i32, i32
  }
  func.func @transform_1(%arg0: i32) -> (i32, i32) {
    %c0_i32 = arith.constant 0 : i32
    %c0_i32_0 = arith.constant 0 : i32
    return %arg0, %c0_i32 : i32, i32
  }
  func.func @transform_2(%arg0: i32) -> (i32, i32) {
    %c0_i32 = arith.constant 0 : i32
    %c0_i32_0 = arith.constant 0 : i32
    %c0_i32_1 = arith.constant 0 : i32
    return %c0_i32, %c0_i32_0 : i32, i32
  }
  func.func @transform_3(%arg0: i32) -> (i32, i32) {
    %c0_i32 = arith.constant 0 : i32
    %c0_i32_0 = arith.constant 0 : i32
    %c0_i32_1 = arith.constant 0 : i32
    return %c0_i32, %c0_i32_0 : i32, i32
  }
  func.func @transform_4(%arg0: i32) -> (i32, i32) {
    %c0_i32 = arith.constant 0 : i32
    %c0_i32_0 = arith.constant 0 : i32
    %c0_i32_1 = arith.constant 0 : i32
    return %c0_i32, %c0_i32_0 : i32, i32
  }
  func.func @transform_5(%arg0: i32) -> (i32, i32) {
    %c0_i32 = arith.constant 0 : i32
    %c0_i32_0 = arith.constant 0 : i32
    %c0_i32_1 = arith.constant 0 : i32
    return %c0_i32, %c0_i32_0 : i32, i32
  }
  func.func @transform_6(%arg0: i32) -> (i32, i32) {
    %c0_i32 = arith.constant 0 : i32
    %c0_i32_0 = arith.constant 0 : i32
    %c0_i32_1 = arith.constant 0 : i32
    return %c0_i32, %c0_i32_0 : i32, i32
  }
  func.func @transform_7(%arg0: i32) -> (i32, i32) {
    %c0_i32 = arith.constant 0 : i32
    %c0_i32_0 = arith.constant 0 : i32
    %c0_i32_1 = arith.constant 0 : i32
    return %c0_i32, %c0_i32_0 : i32, i32
  }
  func.func @transform_8(%arg0: i32) -> (i32, i32) {
    %c0_i32 = arith.constant 0 : i32
    %c0_i32_0 = arith.constant 0 : i32
    return %arg0, %c0_i32 : i32, i32
  }
}

</mosaic_0001>

<llo_original>
// kernel: tpu_custom_call.1
$region0: #{tpu_custom_call.1}
  #allocation0 [shape = 'u32[]', space=smem, size = 0x4, offset = 0x4, fixed_abs, tag = 'smem constant byte address 0x4 - core index']
  #allocation1 [shape = 'u32[144,128]{1,0:T(1,128)}', space=vmem, size = 0x12000, scoped, tag = 'internal scratch']
  %s0 = inlined_call_operand.vmem [shape: f32[256,32], index: 0, kind: input, shape index: {}]
  %s1 = inlined_call_operand.vmem [shape: f32[256,32], index: 1, kind: input, shape index: {}]
  %s2 = inlined_call_operand.vmem [shape: bf16[32,256], index: 2, kind: input, shape index: {}]
  %s3 = inlined_call_operand.vmem [shape: f32[1,256], index: 3, kind: input, shape index: {}]
  %s4 = inlined_call_operand.vmem [shape: f32[1,256], index: 4, kind: input, shape index: {}]
  %s5 = inlined_call_operand.vmem [shape: f32[1,256], index: 5, kind: input, shape index: {}]
  %s6 = inlined_call_operand.vmem [shape: bf16[256,128], index: 6, kind: input, shape index: {}]
  %s7 = inlined_call_operand.vmem [shape: f32[1,128], index: 7, kind: input, shape index: {}]
  %s8 = inlined_call_operand.hbm [shape: f32[256,128], index: 8, kind: output, shape index: {}]
  %s9 = sld [smem:[#allocation0]]
  $region65: #{tpu_custom_call.1} parent=0
    _
  %s11 = ssub.s32 1, %s9
  %s12 = scalar_select 0, %s11, %s9
  $region1: #{tpu_custom_call.1} parent=0
    #allocation2 [shape = 'u8[131072]{0}', space=vmem, size = 0x20000, scoped, tag = 'output window, operand 0']
    #allocation3 [shape = 's32[2]{0}', space=sflag, size = 0x8, scoped, tag = 'scoped memory for tpu_custom_call.1']
    %13 = vsyncpa [#allocation3], 0
    %s14 = scalar_lea.sflag [#allocation3], 1
    %15 = vsyncpa %s14, 0
    loop: start=0, step=1, limit=4
    $region2: #{tpu_custom_call.1} parent=1 // loop_pre_header
      _
    $region3: #{tpu_custom_call.1} parent=1 // loop_header
      %s17 = sphi 0, %s21
      %p18 = scmp.ge.s32.totalorder %s17, 4
      %s27 = sphi 0, %s29
      %s30 = sphi 0, %s27
      %s31 = sphi 0, %s30
      %s47 = sphi 0, %s31
      %s53 = sphi 0, %s55
      %s56 = sphi 0, %s53
      %s57 = sphi 0, %s56
      %s73 = sphi 0, %s57
      %s77 = sphi 0, %s77
      %s79 = sphi 0, %s77
      %s80 = sphi 0, %s79
      %s94 = sphi 0, %s80
      %s98 = sphi 0, %s98
      %s100 = sphi 0, %s98
      %s101 = sphi 0, %s100
      %s115 = sphi 0, %s101
      %s119 = sphi 0, %s119
      %s121 = sphi 0, %s119
      %s122 = sphi 0, %s121
      %s136 = sphi 0, %s122
      %s140 = sphi 0, %s140
      %s142 = sphi 0, %s140
      %s143 = sphi 0, %s142
      %s157 = sphi 0, %s143
      %s161 = sphi 0, %s161
      %s163 = sphi 0, %s161
      %s164 = sphi 0, %s163
      %s178 = sphi 0, %s164
      %s182 = sphi 0, %s182
      %s184 = sphi 0, %s182
      %s185 = sphi 0, %s184
      %s199 = sphi 0, %s185
      %s205 = sphi 0, %s207
      %s208 = sphi 0, %s205
      %s209 = sphi 0, %s208
      %s225 = sphi 0, %s209
    $region4: #{tpu_custom_call.1} parent=1 // loop_header_branch
      %20 = sbr.rel (%p18) target = $region8
    $region5: #{tpu_custom_call.1} parent=1 // loop_body
      %s22 = ssub.s32 %s17, 1
      %s23 = ssub.s32 %s17, 2
      %s24 = sadd.s32 %s17, 1
      %s25 = ssub.s32 %s17, %s24
      %p26 = scmp.eq.s32.totalorder %s25, 0
      %s28 = sadd.s32 %s27, 1
      %s29 = scalar_select %p26, %s27, %s28
      %p32 = pneg %p26
      %p33 = scmp.eq.s32.totalorder %s17, 1
      %p34 = por %p32, %p33
      %p35 = scmp.ne.s32.totalorder %s27, %s30
      %p36 = scmp.eq.s32.totalorder %s17, 0
      %p37 = por %p35, %p36
      %p38 = scmp.ne.s32.totalorder %s27, %s30
      %p39 = scmp.eq.s32.totalorder %s22, 1
      %p40 = por %p38, %p39
      %p41 = scmp.ne.s32.totalorder %s30, %s31
      %p42 = scmp.eq.s32.totalorder %s22, 0
      %p43 = por %p41, %p42
      %p44 = scmp.ne.s32.totalorder %s30, %s31
      %p45 = scmp.eq.s32.totalorder %s23, 1
      %p46 = por %p44, %p45
      %p48 = scmp.ne.s32.totalorder %s31, %s47
      %p49 = scmp.eq.s32.totalorder %s23, 0
      %p50 = por %p48, %p49
      %s51 = ssub.s32 %s17, %s24
      %p52 = scmp.eq.s32.totalorder %s51, 0
      %s54 = sadd.s32 %s53, 1
      %s55 = scalar_select %p52, %s53, %s54
      %p58 = pneg %p52
      %p59 = scmp.eq.s32.totalorder %s17, 1
      %p60 = por %p58, %p59
      %p61 = scmp.ne.s32.totalorder %s53, %s56
      %p62 = scmp.eq.s32.totalorder %s17, 0
      %p63 = por %p61, %p62
      %p64 = scmp.ne.s32.totalorder %s53, %s56
      %p65 = scmp.eq.s32.totalorder %s22, 1
      %p66 = por %p64, %p65
      %p67 = scmp.ne.s32.totalorder %s56, %s57
      %p68 = scmp.eq.s32.totalorder %s22, 0
      %p69 = por %p67, %p68
      %p70 = scmp.ne.s32.totalorder %s56, %s57
      %p71 = scmp.eq.s32.totalorder %s23, 1
      %p72 = por %p70, %p71
      %p74 = scmp.ne.s32.totalorder %s57, %s73
      %p75 = scmp.eq.s32.totalorder %s23, 0
      %p76 = por %p74, %p75
      %s78 = sadd.s32 %s77, 1
      %p81 = scmp.eq.s32.totalorder %s17, 1
      %p82 = scmp.ne.s32.totalorder %s77, %s79
      %p83 = scmp.eq.s32.totalorder %s17, 0
      %p84 = por %p82, %p83
      %p85 = scmp.ne.s32.totalorder %s77, %s79
      %p86 = scmp.eq.s32.totalorder %s22, 1
      %p87 = por %p85, %p86
      %p88 = scmp.ne.s32.totalorder %s79, %s80
      %p89 = scmp.eq.s32.totalorder %s22, 0
      %p90 = por %p88, %p89
      %p91 = scmp.ne.s32.totalorder %s79, %s80
      %p92 = scmp.eq.s32.totalorder %s23, 1
      %p93 = por %p91, %p92
      %p95 = scmp.ne.s32.totalorder %s80, %s94
      %p96 = scmp.eq.s32.totalorder %s23, 0
      %p97 = por %p95, %p96
      %s99 = sadd.s32 %s98, 1
      %p102 = scmp.eq.s32.totalorder %s17, 1
      %p103 = scmp.ne.s32.totalorder %s98, %s100
      %p104 = scmp.eq.s32.totalorder %s17, 0
      %p105 = por %p103, %p104
      %p106 = scmp.ne.s32.totalorder %s98, %s100
      %p107 = scmp.eq.s32.totalorder %s22, 1
      %p108 = por %p106, %p107
      %p109 = scmp.ne.s32.totalorder %s100, %s101
      %p110 = scmp.eq.s32.totalorder %s22, 0
      %p111 = por %p109, %p110
      %p112 = scmp.ne.s32.totalorder %s100, %s101
      %p113 = scmp.eq.s32.totalorder %s23, 1
      %p114 = por %p112, %p113
      %p116 = scmp.ne.s32.totalorder %s101, %s115
      %p117 = scmp.eq.s32.totalorder %s23, 0
      %p118 = por %p116, %p117
      %s120 = sadd.s32 %s119, 1
      %p123 = scmp.eq.s32.totalorder %s17, 1
      %p124 = scmp.ne.s32.totalorder %s119, %s121
      %p125 = scmp.eq.s32.totalorder %s17, 0
      %p126 = por %p124, %p125
      %p127 = scmp.ne.s32.totalorder %s119, %s121
      %p128 = scmp.eq.s32.totalorder %s22, 1
      %p129 = por %p127, %p128
      %p130 = scmp.ne.s32.totalorder %s121, %s122
      %p131 = scmp.eq.s32.totalorder %s22, 0
      %p132 = por %p130, %p131
      %p133 = scmp.ne.s32.totalorder %s121, %s122
      %p134 = scmp.eq.s32.totalorder %s23, 1
      %p135 = por %p133, %p134
      %p137 = scmp.ne.s32.totalorder %s122, %s136
      %p138 = scmp.eq.s32.totalorder %s23, 0
      %p139 = por %p137, %p138
      %s141 = sadd.s32 %s140, 1
      %p144 = scmp.eq.s32.totalorder %s17, 1
      %p145 = scmp.ne.s32.totalorder %s140, %s142
      %p146 = scmp.eq.s32.totalorder %s17, 0
      %p147 = por %p145, %p146
      %p148 = scmp.ne.s32.totalorder %s140, %s142
      %p149 = scmp.eq.s32.totalorder %s22, 1
      %p150 = por %p148, %p149
      %p151 = scmp.ne.s32.totalorder %s142, %s143
      %p152 = scmp.eq.s32.totalorder %s22, 0
      %p153 = por %p151, %p152
      %p154 = scmp.ne.s32.totalorder %s142, %s143
      %p155 = scmp.eq.s32.totalorder %s23, 1
      %p156 = por %p154, %p155
      %p158 = scmp.ne.s32.totalorder %s143, %s157
      %p159 = scmp.eq.s32.totalorder %s23, 0
      %p160 = por %p158, %p159
      %s162 = sadd.s32 %s161, 1
      %p165 = scmp.eq.s32.totalorder %s17, 1
      %p166 = scmp.ne.s32.totalorder %s161, %s163
      %p167 = scmp.eq.s32.totalorder %s17, 0
      %p168 = por %p166, %p167
      %p169 = scmp.ne.s32.totalorder %s161, %s163
      %p170 = scmp.eq.s32.totalorder %s22, 1
      %p171 = por %p169, %p170
      %p172 = scmp.ne.s32.totalorder %s163, %s164
      %p173 = scmp.eq.s32.totalorder %s22, 0
      %p174 = por %p172, %p173
      %p175 = scmp.ne.s32.totalorder %s163, %s164
      %p176 = scmp.eq.s32.totalorder %s23, 1
      %p177 = por %p175, %p176
      %p179 = scmp.ne.s32.totalorder %s164, %s178
      %p180 = scmp.eq.s32.totalorder %s23, 0
      %p181 = por %p179, %p180
      %s183 = sadd.s32 %s182, 1
      %p186 = scmp.eq.s32.totalorder %s17, 1
      %p187 = scmp.ne.s32.totalorder %s182, %s184
      %p188 = scmp.eq.s32.totalorder %s17, 0
      %p189 = por %p187, %p188
      %p190 = scmp.ne.s32.totalorder %s182, %s184
      %p191 = scmp.eq.s32.totalorder %s22, 1
      %p192 = por %p190, %p191
      %p193 = scmp.ne.s32.totalorder %s184, %s185
      %p194 = scmp.eq.s32.totalorder %s22, 0
      %p195 = por %p193, %p194
      %p196 = scmp.ne.s32.totalorder %s184, %s185
      %p197 = scmp.eq.s32.totalorder %s23, 1
      %p198 = por %p196, %p197
      %p200 = scmp.ne.s32.totalorder %s185, %s199
      %p201 = scmp.eq.s32.totalorder %s23, 0
      %p202 = por %p200, %p201
      %s203 = ssub.s32 %s17, %s24
      %p204 = scmp.eq.s32.totalorder %s203, 0
      %s206 = sadd.s32 %s205, 1
      %s207 = scalar_select %p204, %s205, %s206
      %p210 = pneg %p204
      %p211 = scmp.eq.s32.totalorder %s17, 1
      %p212 = por %p210, %p211
      %p213 = scmp.ne.s32.totalorder %s205, %s208
      %p214 = scmp.eq.s32.totalorder %s17, 0
      %p215 = por %p213, %p214
      %p216 = scmp.ne.s32.totalorder %s205, %s208
      %p217 = scmp.eq.s32.totalorder %s22, 1
      %p218 = por %p216, %p217
      %p219 = scmp.ne.s32.totalorder %s208, %s209
      %p220 = scmp.eq.s32.totalorder %s22, 0
      %p221 = por %p219, %p220
      %p222 = scmp.ne.s32.totalorder %s208, %s209
      %p223 = scmp.eq.s32.totalorder %s23, 1
      %p224 = por %p222, %p223
      %p226 = scmp.ne.s32.totalorder %s209, %s225
      %p227 = scmp.eq.s32.totalorder %s23, 0
      %p228 = por %p226, %p227
      %p229 = scmp.le.s32.totalorder 1, %s17
      %p230 = scmp.lt.s32.totalorder %s17, 3
      %p231 = pnand %p229, %p230
      %p232 = pneg %p231
      // Predicated region
      $region9: #{tpu_custom_call.1} parent=5 // pred_check
        _
      $region10: #{tpu_custom_call.1} parent=5 // pred_check_branch
        %234 = sbr.rel (%p231) target = $region12
      $region11: #{tpu_custom_call.1} parent=5 // pred_region
        %s235 = ssub.s32 %s17, 1
        // Predicated region
        $region13: #{tpu_custom_call.1} parent=11 // pred_check
          %p236 = pneg %p90
        $region14: #{tpu_custom_call.1} parent=11 // pred_check_branch
          %238 = sbr.rel (%p236) target = $region16
        $region15: #{tpu_custom_call.1} parent=11 // pred_region
          _
        $region16: #{tpu_custom_call.1} parent=11 // pred_fallthru
          _
        // Predicated region
        $region17: #{tpu_custom_call.1} parent=11 // pred_check
          %p239 = pneg %p111
        $region18: #{tpu_custom_call.1} parent=11 // pred_check_branch
          %241 = sbr.rel (%p239) target = $region20
        $region19: #{tpu_custom_call.1} parent=11 // pred_region
          _
        $region20: #{tpu_custom_call.1} parent=11 // pred_fallthru
          _
        // Predicated region
        $region21: #{tpu_custom_call.1} parent=11 // pred_check
          %p242 = pneg %p132
        $region22: #{tpu_custom_call.1} parent=11 // pred_check_branch
          %244 = sbr.rel (%p242) target = $region24
        $region23: #{tpu_custom_call.1} parent=11 // pred_region
          _
        $region24: #{tpu_custom_call.1} parent=11 // pred_fallthru
          _
        // Predicated region
        $region25: #{tpu_custom_call.1} parent=11 // pred_check
          %p245 = pneg %p153
        $region26: #{tpu_custom_call.1} parent=11 // pred_check_branch
          %247 = sbr.rel (%p245) target = $region28
        $region27: #{tpu_custom_call.1} parent=11 // pred_region
          _
        $region28: #{tpu_custom_call.1} parent=11 // pred_fallthru
          _
        // Predicated region
        $region29: #{tpu_custom_call.1} parent=11 // pred_check
          %p248 = pneg %p174
        $region30: #{tpu_custom_call.1} parent=11 // pred_check_branch
          %250 = sbr.rel (%p248) target = $region32
        $region31: #{tpu_custom_call.1} parent=11 // pred_region
          _
        $region32: #{tpu_custom_call.1} parent=11 // pred_fallthru
          _
        // Predicated region
        $region33: #{tpu_custom_call.1} parent=11 // pred_check
          %p251 = pneg %p195
        $region34: #{tpu_custom_call.1} parent=11 // pred_check_branch
          %253 = sbr.rel (%p251) target = $region36
        $region35: #{tpu_custom_call.1} parent=11 // pred_region
          _
        $region36: #{tpu_custom_call.1} parent=11 // pred_fallthru
          _
      $region12: #{tpu_custom_call.1} parent=5 // pred_fallthru
        _
      %p254 = scmp.lt.s32.totalorder %s17, 2
      // Predicated region
      $region37: #{tpu_custom_call.1} parent=5 // pred_check
        %p255 = pneg %p254
      $region38: #{tpu_custom_call.1} parent=5 // pred_check_branch
        %257 = sbr.rel (%p255) target = $region40
      $region39: #{tpu_custom_call.1} parent=5 // pred_region
        // Predicated region
        $region41: #{tpu_custom_call.1} parent=39 // pred_check
          %p258 = pneg %p37
        $region42: #{tpu_custom_call.1} parent=39 // pred_check_branch
          %260 = sbr.rel (%p258) target = $region44
        $region43: #{tpu_custom_call.1} parent=39 // pred_region
          %s261 = smul.u32 16, %s17
          %p262 = scmp.lt.s32.totalorder %s261, 31
          %s263 = scalar_select %p262, %s261, 31
          %s264 = smul.addr %s263, 8
          %s265 = scalar_lea.vmem %s0, %s264
          %s266 = smul.u32 16, %s17
        $region44: #{tpu_custom_call.1} parent=39 // pred_fallthru
          _
        // Predicated region
        $region45: #{tpu_custom_call.1} parent=39 // pred_check
          %p267 = pneg %p63
        $region46: #{tpu_custom_call.1} parent=39 // pred_check_branch
          %269 = sbr.rel (%p267) target = $region48
        $region47: #{tpu_custom_call.1} parent=39 // pred_region
          %s270 = smul.u32 16, %s17
          %p271 = scmp.lt.s32.totalorder %s270, 31
          %s272 = scalar_select %p271, %s270, 31
          %s273 = smul.addr %s272, 8
          %s274 = scalar_lea.vmem %s1, %s273
          %s275 = smul.u32 16, %s17
        $region48: #{tpu_custom_call.1} parent=39 // pred_fallthru
          _
      $region40: #{tpu_custom_call.1} parent=5 // pred_fallthru
        _
      %p276 = scmp.le.s32.totalorder 1, %s17
      %p277 = scmp.lt.s32.totalorder %s17, 3
      %p278 = pnand %p276, %p277
      %p279 = pneg %p278
      // Predicated region
      $region49: #{tpu_custom_call.1} parent=5 // pred_check
        _
      $region50: #{tpu_custom_call.1} parent=5 // pred_check_branch
        %281 = sbr.rel (%p278) target = $region52
      $region51: #{tpu_custom_call.1} parent=5 // pred_region
        %s282 = ssub.s32 %s17, 1
        %s283 = smul.u32 16, %s22
        %p284 = scmp.lt.s32.totalorder %s283, 31
        %s285 = scalar_select %p284, %s283, 31
        %s286 = smul.addr %s285, 8
        %s287 = scalar_lea.vmem %s0, %s286
        %p288 = pneg %p43
        %p289 = pneg %p40
        %s290 = smul.u32 16, %s22
        %p291 = scmp.lt.s32.totalorder %s290, 31
        %s292 = scalar_select %p291, %s290, 31
        %s293 = smul.addr %s292, 8
        %s294 = scalar_lea.vmem %s1, %s293
        %p295 = pneg %p69
        %p296 = pneg %p66
        %p297 = pneg %p90
        %p298 = pneg %p87
        %p299 = pneg %p111
        %p300 = pneg %p108
        %p301 = pneg %p132
        %p302 = pneg %p129
        %p303 = pneg %p153
        %p304 = pneg %p150
        %p305 = pneg %p174
        %p306 = pneg %p171
        %p307 = pneg %p195
        %p308 = pneg %p192
        %p309 = pneg %p221
        %p310 = pneg %p218
        %s311 = sand.u32 %s208, 1
        %s312 = scalar_lea.sflag [#allocation3], %s311
        %s313 = sand.u32 %s208, 1
        %s314 = smul.addr %s313, 128
        %s315 = scalar_lea.vmem [#allocation2], %s314
        %s316 = smul.u32 16, %s22
        %p317 = scmp.lt.s32.totalorder %s316, 31
        %s318 = scalar_select %p317, %s316, 31
        %s319 = smul.addr %s318, 8
        %s320 = scalar_lea.vmem %s0, %s319
        %s321 = smul.u32 16, %s22
        %s322 = smul.u32 16, %s22
        %p323 = scmp.lt.s32.totalorder %s322, 31
        %s324 = scalar_select %p323, %s322, 31
        %s325 = smul.addr %s324, 8
        %s326 = scalar_lea.vmem %s1, %s325
        %s327 = smul.u32 16, %s22
        %s328 = smul.u32 16, %s22
        %v330 = vld [vmem:[%s320] sm:$0xff]
        %v331 = vld [vmem:[%s320 + $0x8] sm:$0xff]
        %v332 = vld [vmem:[%s320 + $0x10] sm:$0xff]
        %v333 = vld [vmem:[%s320 + $0x18] sm:$0xff]
        %v334 = vld [vmem:[%s320 + $0x20] sm:$0xff]
        %v335 = vld [vmem:[%s320 + $0x28] sm:$0xff]
        %v336 = vld [vmem:[%s320 + $0x30] sm:$0xff]
        %v337 = vld [vmem:[%s320 + $0x38] sm:$0xff]
        %v338 = vld [vmem:[%s320 + $0x40] sm:$0xff]
        %v339 = vld [vmem:[%s320 + $0x48] sm:$0xff]
        %v340 = vld [vmem:[%s320 + $0x50] sm:$0xff]
        %v341 = vld [vmem:[%s320 + $0x58] sm:$0xff]
        %v342 = vld [vmem:[%s320 + $0x60] sm:$0xff]
        %v343 = vld [vmem:[%s320 + $0x68] sm:$0xff]
        %v344 = vld [vmem:[%s320 + $0x70] sm:$0xff]
        %v345 = vld [vmem:[%s320 + $0x78] sm:$0xff]
        %v346 = vld [vmem:[%s326] sm:$0xff]
        %v347 = vld [vmem:[%s326 + $0x8] sm:$0xff]
        %v348 = vld [vmem:[%s326 + $0x10] sm:$0xff]
        %v349 = vld [vmem:[%s326 + $0x18] sm:$0xff]
        %v350 = vld [vmem:[%s326 + $0x20] sm:$0xff]
        %v351 = vld [vmem:[%s326 + $0x28] sm:$0xff]
        %v352 = vld [vmem:[%s326 + $0x30] sm:$0xff]
        %v353 = vld [vmem:[%s326 + $0x38] sm:$0xff]
        %v354 = vld [vmem:[%s326 + $0x40] sm:$0xff]
        %v355 = vld [vmem:[%s326 + $0x48] sm:$0xff]
        %v356 = vld [vmem:[%s326 + $0x50] sm:$0xff]
        %v357 = vld [vmem:[%s326 + $0x58] sm:$0xff]
        %v358 = vld [vmem:[%s326 + $0x60] sm:$0xff]
        %v359 = vld [vmem:[%s326 + $0x68] sm:$0xff]
        %v360 = vld [vmem:[%s326 + $0x70] sm:$0xff]
        %v361 = vld [vmem:[%s326 + $0x78] sm:$0xff]
        %v362 = vld [vmem:[%s3] sm:$0x3]
        %v363 = vld [vmem:[%s4] sm:$0x3]
        %v364 = vld [vmem:[%s5] sm:$0x3]
        %v365 = vld [vmem:[%s7] sm:$0x1]
        %vm366 = vcmp.ne.f32.partialorder %v330, %v330
        %vm367 = vcmp.ne.f32.partialorder %v331, %v331
        %vm368 = vcmp.ne.f32.partialorder %v332, %v332
        %vm369 = vcmp.ne.f32.partialorder %v333, %v333
        %vm370 = vcmp.ne.f32.partialorder %v334, %v334
        %vm371 = vcmp.ne.f32.partialorder %v335, %v335
        %vm372 = vcmp.ne.f32.partialorder %v336, %v336
        %vm373 = vcmp.ne.f32.partialorder %v337, %v337
        %vm374 = vcmp.ne.f32.partialorder %v338, %v338
        %vm375 = vcmp.ne.f32.partialorder %v339, %v339
        %vm376 = vcmp.ne.f32.partialorder %v340, %v340
        %vm377 = vcmp.ne.f32.partialorder %v341, %v341
        %vm378 = vcmp.ne.f32.partialorder %v342, %v342
        %vm379 = vcmp.ne.f32.partialorder %v343, %v343
        %vm380 = vcmp.ne.f32.partialorder %v344, %v344
        %vm381 = vcmp.ne.f32.partialorder %v345, %v345
        %vm382 = vmxor %vm366, 1
        %vm383 = vmxor %vm367, 1
        %vm384 = vmxor %vm368, 1
        %vm385 = vmxor %vm369, 1
        %vm386 = vmxor %vm370, 1
        %vm387 = vmxor %vm371, 1
        %vm388 = vmxor %vm372, 1
        %vm389 = vmxor %vm373, 1
        %vm390 = vmxor %vm374, 1
        %vm391 = vmxor %vm375, 1
        %vm392 = vmxor %vm376, 1
        %vm393 = vmxor %vm377, 1
        %vm394 = vmxor %vm378, 1
        %vm395 = vmxor %vm379, 1
        %vm396 = vmxor %vm380, 1
        %vm397 = vmxor %vm381, 1
        %v398 = vsel %vm382, %v330, 0.0
        %v399 = vsel %vm383, %v331, 0.0
        %v400 = vsel %vm384, %v332, 0.0
        %v401 = vsel %vm385, %v333, 0.0
        %v402 = vsel %vm386, %v334, 0.0
        %v403 = vsel %vm387, %v335, 0.0
        %v404 = vsel %vm388, %v336, 0.0
        %v405 = vsel %vm389, %v337, 0.0
        %v406 = vsel %vm390, %v338, 0.0
        %v407 = vsel %vm391, %v339, 0.0
        %v408 = vsel %vm392, %v340, 0.0
        %v409 = vsel %vm393, %v341, 0.0
        %v410 = vsel %vm394, %v342, 0.0
        %v411 = vsel %vm395, %v343, 0.0
        %v412 = vsel %vm396, %v344, 0.0
        %v413 = vsel %vm397, %v345, 0.0
        %v414 = vsel %vm382, 1, 0
        %v415 = vsel %vm383, 1, 0
        %v416 = vsel %vm384, 1, 0
        %v417 = vsel %vm385, 1, 0
        %v418 = vsel %vm386, 1, 0
        %v419 = vsel %vm387, 1, 0
        %v420 = vsel %vm388, 1, 0
        %v421 = vsel %vm389, 1, 0
        %v422 = vsel %vm390, 1, 0
        %v423 = vsel %vm391, 1, 0
        %v424 = vsel %vm392, 1, 0
        %v425 = vsel %vm393, 1, 0
        %v426 = vsel %vm394, 1, 0
        %v427 = vsel %vm395, 1, 0
        %v428 = vsel %vm396, 1, 0
        %v429 = vsel %vm397, 1, 0
        %v430 = vcvt.s32.f32 %v414
        %v431 = vcvt.s32.f32 %v415
        %v432 = vcvt.s32.f32 %v416
        %v433 = vcvt.s32.f32 %v417
        %v434 = vcvt.s32.f32 %v418
        %v435 = vcvt.s32.f32 %v419
        %v436 = vcvt.s32.f32 %v420
        %v437 = vcvt.s32.f32 %v421
        %v438 = vcvt.s32.f32 %v422
        %v439 = vcvt.s32.f32 %v423
        %v440 = vcvt.s32.f32 %v424
        %v441 = vcvt.s32.f32 %v425
        %v442 = vcvt.s32.f32 %v426
        %v443 = vcvt.s32.f32 %v427
        %v444 = vcvt.s32.f32 %v428
        %v445 = vcvt.s32.f32 %v429
        %v446 = vmul.f32 %v346, %v430
        %v447 = vmul.f32 %v347, %v431
        %v448 = vmul.f32 %v348, %v432
        %v449 = vmul.f32 %v349, %v433
        %v450 = vmul.f32 %v350, %v434
        %v451 = vmul.f32 %v351, %v435
        %v452 = vmul.f32 %v352, %v436
        %v453 = vmul.f32 %v353, %v437
        %v454 = vmul.f32 %v354, %v438
        %v455 = vmul.f32 %v355, %v439
        %v456 = vmul.f32 %v356, %v440
        %v457 = vmul.f32 %v357, %v441
        %v458 = vmul.f32 %v358, %v442
        %v459 = vmul.f32 %v359, %v443
        %v460 = vmul.f32 %v360, %v444
        %v461 = vmul.f32 %v361, %v445
        %v462 = vadd.f32 %v446, 1.0
        %v463 = vlog2.pop %v462
        %v464 = vmul.f32 %v463, 0.6931472
        %v465 = vmul.f32 -0.5, %v446
        %v466 = vadd.f32 %v465, 1.0
        %v467 = vmul.f32 %v466, %v446
        %v468 = vand.u32 2147483647, %v446
        %vm469 = vcmp.lt.f32.partialorder %v468, 0.0004427343
        %v470 = vsel %vm469, %v467, %v464
        %v471 = vadd.f32 %v447, 1.0
        %v472 = vlog2.pop %v471
        %v473 = vmul.f32 %v472, 0.6931472
        %v474 = vmul.f32 -0.5, %v447
        %v475 = vadd.f32 %v474, 1.0
        %v476 = vmul.f32 %v475, %v447
        %v477 = vand.u32 2147483647, %v447
        %vm478 = vcmp.lt.f32.partialorder %v477, 0.0004427343
        %v479 = vsel %vm478, %v476, %v473
        %v480 = vadd.f32 %v448, 1.0
        %v481 = vlog2.pop %v480
        %v482 = vmul.f32 %v481, 0.6931472
        %v483 = vmul.f32 -0.5, %v448
        %v484 = vadd.f32 %v483, 1.0
        %v485 = vmul.f32 %v484, %v448
        %v486 = vand.u32 2147483647, %v448
        %vm487 = vcmp.lt.f32.partialorder %v486, 0.0004427343
        %v488 = vsel %vm487, %v485, %v482
        %v489 = vadd.f32 %v449, 1.0
        %v490 = vlog2.pop %v489
        %v491 = vmul.f32 %v490, 0.6931472
        %v492 = vmul.f32 -0.5, %v449
        %v493 = vadd.f32 %v492, 1.0
        %v494 = vmul.f32 %v493, %v449
        %v495 = vand.u32 2147483647, %v449
        %vm496 = vcmp.lt.f32.partialorder %v495, 0.0004427343
        %v497 = vsel %vm496, %v494, %v491
        %v498 = vadd.f32 %v450, 1.0
        %v499 = vlog2.pop %v498
        %v500 = vmul.f32 %v499, 0.6931472
        %v501 = vmul.f32 -0.5, %v450
        %v502 = vadd.f32 %v501, 1.0
        %v503 = vmul.f32 %v502, %v450
        %v504 = vand.u32 2147483647, %v450
        %vm505 = vcmp.lt.f32.partialorder %v504, 0.0004427343
        %v506 = vsel %vm505, %v503, %v500
        %v507 = vadd.f32 %v451, 1.0
        %v508 = vlog2.pop %v507
        %v509 = vmul.f32 %v508, 0.6931472
        %v510 = vmul.f32 -0.5, %v451
        %v511 = vadd.f32 %v510, 1.0
        %v512 = vmul.f32 %v511, %v451
        %v513 = vand.u32 2147483647, %v451
        %vm514 = vcmp.lt.f32.partialorder %v513, 0.0004427343
        %v515 = vsel %vm514, %v512, %v509
        %v516 = vadd.f32 %v452, 1.0
        %v517 = vlog2.pop %v516
        %v518 = vmul.f32 %v517, 0.6931472
        %v519 = vmul.f32 -0.5, %v452
        %v520 = vadd.f32 %v519, 1.0
        %v521 = vmul.f32 %v520, %v452
        %v522 = vand.u32 2147483647, %v452
        %vm523 = vcmp.lt.f32.partialorder %v522, 0.0004427343
        %v524 = vsel %vm523, %v521, %v518
        %v525 = vadd.f32 %v453, 1.0
        %v526 = vlog2.pop %v525
        %v527 = vmul.f32 %v526, 0.6931472
        %v528 = vmul.f32 -0.5, %v453
        %v529 = vadd.f32 %v528, 1.0
        %v530 = vmul.f32 %v529, %v453
        %v531 = vand.u32 2147483647, %v453
        %vm532 = vcmp.lt.f32.partialorder %v531, 0.0004427343
        %v533 = vsel %vm532, %v530, %v527
        %v534 = vadd.f32 %v454, 1.0
        %v535 = vlog2.pop %v534
        %v536 = vmul.f32 %v535, 0.6931472
        %v537 = vmul.f32 -0.5, %v454
        %v538 = vadd.f32 %v537, 1.0
        %v539 = vmul.f32 %v538, %v454
        %v540 = vand.u32 2147483647, %v454
        %vm541 = vcmp.lt.f32.partialorder %v540, 0.0004427343
        %v542 = vsel %vm541, %v539, %v536
        %v543 = vadd.f32 %v455, 1.0
        %v544 = vlog2.pop %v543
        %v545 = vmul.f32 %v544, 0.6931472
        %v546 = vmul.f32 -0.5, %v455
        %v547 = vadd.f32 %v546, 1.0
        %v548 = vmul.f32 %v547, %v455
        %v549 = vand.u32 2147483647, %v455
        %vm550 = vcmp.lt.f32.partialorder %v549, 0.0004427343
        %v551 = vsel %vm550, %v548, %v545
        %v552 = vadd.f32 %v456, 1.0
        %v553 = vlog2.pop %v552
        %v554 = vmul.f32 %v553, 0.6931472
        %v555 = vmul.f32 -0.5, %v456
        %v556 = vadd.f32 %v555, 1.0
        %v557 = vmul.f32 %v556, %v456
        %v558 = vand.u32 2147483647, %v456
        %vm559 = vcmp.lt.f32.partialorder %v558, 0.0004427343
        %v560 = vsel %vm559, %v557, %v554
        %v561 = vadd.f32 %v457, 1.0
        %v562 = vlog2.pop %v561
        %v563 = vmul.f32 %v562, 0.6931472
        %v564 = vmul.f32 -0.5, %v457
        %v565 = vadd.f32 %v564, 1.0
        %v566 = vmul.f32 %v565, %v457
        %v567 = vand.u32 2147483647, %v457
        %vm568 = vcmp.lt.f32.partialorder %v567, 0.0004427343
        %v569 = vsel %vm568, %v566, %v563
        %v570 = vadd.f32 %v458, 1.0
        %v571 = vlog2.pop %v570
        %v572 = vmul.f32 %v571, 0.6931472
        %v573 = vmul.f32 -0.5, %v458
        %v574 = vadd.f32 %v573, 1.0
        %v575 = vmul.f32 %v574, %v458
        %v576 = vand.u32 2147483647, %v458
        %vm577 = vcmp.lt.f32.partialorder %v576, 0.0004427343
        %v578 = vsel %vm577, %v575, %v572
        %v579 = vadd.f32 %v459, 1.0
        %v580 = vlog2.pop %v579
        %v581 = vmul.f32 %v580, 0.6931472
        %v582 = vmul.f32 -0.5, %v459
        %v583 = vadd.f32 %v582, 1.0
        %v584 = vmul.f32 %v583, %v459
        %v585 = vand.u32 2147483647, %v459
        %vm586 = vcmp.lt.f32.partialorder %v585, 0.0004427343
        %v587 = vsel %vm586, %v584, %v581
        %v588 = vadd.f32 %v460, 1.0
        %v589 = vlog2.pop %v588
        %v590 = vmul.f32 %v589, 0.6931472
        %v591 = vmul.f32 -0.5, %v460
        %v592 = vadd.f32 %v591, 1.0
        %v593 = vmul.f32 %v592, %v460
        %v594 = vand.u32 2147483647, %v460
        %vm595 = vcmp.lt.f32.partialorder %v594, 0.0004427343
        %v596 = vsel %vm595, %v593, %v590
        %v597 = vadd.f32 %v461, 1.0
        %v598 = vlog2.pop %v597
        %v599 = vmul.f32 %v598, 0.6931472
        %v600 = vmul.f32 -0.5, %v461
        %v601 = vadd.f32 %v600, 1.0
        %v602 = vmul.f32 %v601, %v461
        %v603 = vand.u32 2147483647, %v461
        %vm604 = vcmp.lt.f32.partialorder %v603, 0.0004427343
        %v605 = vsel %vm604, %v602, %v599
        %v606 = vmul.f32 %v398, %v470
        %v607 = vmul.f32 %v399, %v479
        %v608 = vmul.f32 %v400, %v488
        %v609 = vmul.f32 %v401, %v497
        %v610 = vmul.f32 %v402, %v506
        %v611 = vmul.f32 %v403, %v515
        %v612 = vmul.f32 %v404, %v524
        %v613 = vmul.f32 %v405, %v533
        %v614 = vmul.f32 %v406, %v542
        %v615 = vmul.f32 %v407, %v551
        %v616 = vmul.f32 %v408, %v560
        %v617 = vmul.f32 %v409, %v569
        %v618 = vmul.f32 %v410, %v578
        %v619 = vmul.f32 %v411, %v587
        %v620 = vmul.f32 %v412, %v596
        %v621 = vmul.f32 %v413, %v605
        %v622 = vpack.c.bf16 %v607, %v606
        %v623 = vpack.c.bf16 %v609, %v608
        %v624 = vpack.c.bf16 %v611, %v610
        %v625 = vpack.c.bf16 %v613, %v612
        %v626 = vpack.c.bf16 %v615, %v614
        %v627 = vpack.c.bf16 %v617, %v616
        %v628 = vpack.c.bf16 %v619, %v618
        %v629 = vpack.c.bf16 %v621, %v620
        %v630 = vld [vmem:[%s2] sm:$0xff]
        %v631 = vld [vmem:[%s2 + $0x8] sm:$0xff]
        %v632 = vld [vmem:[%s2 + $0x10] sm:$0xff]
        %v633 = vld [vmem:[%s2 + $0x18] sm:$0xff]
        %v635 = vlaneseq
        %v636 = vshrl.u32 %v635, 7
        %v637 = vsub.s32 0, %v636
        %v638 = vrot.slane %v362, %v637
        %v639 = vlaneseq
        %v640 = vshrl.u32 %v639, 7
        %v641 = vsub.s32 1, %v640
        %v642 = vrot.slane %v362, %v641
        %v649 = vunpack.c.l.b16 %v630
        %v650 = vunpack.c.h.b16 %v630
        %v651 = vunpack.c.l.b16 %v631
        %v652 = vunpack.c.h.b16 %v631
        %v653 = vunpack.c.l.b16 %v632
        %v654 = vunpack.c.h.b16 %v632
        %v655 = vunpack.c.l.b16 %v633
        %v656 = vunpack.c.h.b16 %v633
        %v657 = vpack.c.b16 %v651, %v649
        %v658 = vpack.c.b16 %v652, %v650
        %v659 = vpack.c.b16 %v655, %v653
        %v660 = vpack.c.b16 %v656, %v654
        %vm665 = vcmask 261120
        %v667 = vsel %vm665, %v622, 0
        %v670 = vsel %vm665, %v623, 0
        %v673 = vsel %vm665, %v624, 0
        %v676 = vsel %vm665, %v625, 0
        %v679 = vsel %vm665, %v626, 0
        %v682 = vsel %vm665, %v627, 0
        %v685 = vsel %vm665, %v628, 0
        %v688 = vsel %vm665, %v629, 0
        %690 = vmatprep.subr.bf16.mxu0 %v658
        %691 = vmatpush1.bf16.msra.mxu0 %v657
        %692 = vmatprep.subr.bf16.mxu0 %v660
        %693 = vmatpush1.bf16.msra.mxu0 %v659
        %694 = vmatprep.subr.bf16.mxu0 0
        %695 = vmatpush1.bf16.msra.mxu0 0
        %696 = vmatprep.subr.bf16.mxu0 0
        %697 = vmatpush1.bf16.msra.mxu0 0
        %698 = vmatprep.subr.bf16.mxu0 0
        %699 = vmatpush1.bf16.msra.mxu0 0
        %700 = vmatprep.subr.bf16.mxu0 0
        %701 = vmatpush1.bf16.msra.mxu0 0
        %702 = vmatprep.subr.bf16.mxu0 0
        %703 = vmatpush1.bf16.msra.mxu0 0
        %704 = vmatprep.subr.bf16.mxu0 0
        %705 = vmatpush1.bf16.msra.mxu0 0
        %706 = vmatprep.subr.bf16.mxu0 0
        %707 = vmatpush1.bf16.msra.mxu0 0
        %708 = vmatprep.subr.bf16.mxu0 0
        %709 = vmatpush1.bf16.msra.mxu0 0
        %710 = vmatprep.subr.bf16.mxu0 0
        %711 = vmatpush1.bf16.msra.mxu0 0
        %712 = vmatprep.subr.bf16.mxu0 0
        %713 = vmatpush1.bf16.msra.mxu0 0
        %714 = vmatprep.subr.bf16.mxu0 0
        %715 = vmatpush1.bf16.msra.mxu0 0
        %716 = vmatprep.subr.bf16.mxu0 0
        %717 = vmatpush1.bf16.msra.mxu0 0
        %718 = vmatprep.subr.bf16.mxu0 0
        %719 = vmatpush1.bf16.msra.mxu0 0
        %720 = vmatprep.subr.bf16.mxu0 0
        %721 = vmatpush1.bf16.msra.mxu0 0
        %722 = vmatprep.mubr.bf16.mxu0 0
        %723 = vmatmul.mubr.bf16.gmra.mrb[0].mxu0 %v667
        %v724 = vpop.f32.mrb[0].mxu0
        %v725 = vadd.f32 %v638, %v724
        %v726 = vpop.f32.mrb[0].mxu0
        %v727 = vadd.f32 %v642, %v726
        %v728 = vpop.f32.mrb[0].mxu0
        %v729 = vadd.f32 %v638, %v728
        %v730 = vpop.f32.mrb[0].mxu0
        %v731 = vadd.f32 %v642, %v730
        %732 = vmatprep.mubr.bf16.mxu0 0
        %733 = vmatmul.mubr.bf16.gmra.mrb[0].mxu0 %v670
        %v734 = vpop.f32.mrb[0].mxu0
        %v735 = vadd.f32 %v638, %v734
        %v736 = vpop.f32.mrb[0].mxu0
        %v737 = vadd.f32 %v642, %v736
        %v738 = vpop.f32.mrb[0].mxu0
        %v739 = vadd.f32 %v638, %v738
        %v740 = vpop.f32.mrb[0].mxu0
        %v741 = vadd.f32 %v642, %v740
        %742 = vmatprep.mubr.bf16.mxu0 0
        %743 = vmatmul.mubr.bf16.gmra.mrb[0].mxu0 %v673
        %v744 = vpop.f32.mrb[0].mxu0
        %v745 = vadd.f32 %v638, %v744
        %v746 = vpop.f32.mrb[0].mxu0
        %v747 = vadd.f32 %v642, %v746
        %v748 = vpop.f32.mrb[0].mxu0
        %v749 = vadd.f32 %v638, %v748
        %v750 = vpop.f32.mrb[0].mxu0
        %v751 = vadd.f32 %v642, %v750
        %752 = vmatprep.mubr.bf16.mxu0 0
        %753 = vmatmul.mubr.bf16.gmra.mrb[0].mxu0 %v676
        %v754 = vpop.f32.mrb[0].mxu0
        %v755 = vadd.f32 %v638, %v754
        %v756 = vpop.f32.mrb[0].mxu0
        %v757 = vadd.f32 %v642, %v756
        %v758 = vpop.f32.mrb[0].mxu0
        %v759 = vadd.f32 %v638, %v758
        %v760 = vpop.f32.mrb[0].mxu0
        %v761 = vadd.f32 %v642, %v760
        %762 = vmatprep.mubr.bf16.mxu0 0
        %763 = vmatmul.mubr.bf16.gmra.mrb[0].mxu0 %v679
        %v764 = vpop.f32.mrb[0].mxu0
        %v765 = vadd.f32 %v638, %v764
        %v766 = vpop.f32.mrb[0].mxu0
        %v767 = vadd.f32 %v642, %v766
        %v768 = vpop.f32.mrb[0].mxu0
        %v769 = vadd.f32 %v638, %v768
        %v770 = vpop.f32.mrb[0].mxu0
        %v771 = vadd.f32 %v642, %v770
        %772 = vmatprep.mubr.bf16.mxu0 0
        %773 = vmatmul.mubr.bf16.gmra.mrb[0].mxu0 %v682
        %v774 = vpop.f32.mrb[0].mxu0
        %v775 = vadd.f32 %v638, %v774
        %v776 = vpop.f32.mrb[0].mxu0
        %v777 = vadd.f32 %v642, %v776
        %v778 = vpop.f32.mrb[0].mxu0
        %v779 = vadd.f32 %v638, %v778
        %v780 = vpop.f32.mrb[0].mxu0
        %v781 = vadd.f32 %v642, %v780
        %782 = vmatprep.mubr.bf16.mxu0 0
        %783 = vmatmul.mubr.bf16.gmra.mrb[0].mxu0 %v685
        %v784 = vpop.f32.mrb[0].mxu0
        %v785 = vadd.f32 %v638, %v784
        %v786 = vpop.f32.mrb[0].mxu0
        %v787 = vadd.f32 %v642, %v786
        %v788 = vpop.f32.mrb[0].mxu0
        %v789 = vadd.f32 %v638, %v788
        %v790 = vpop.f32.mrb[0].mxu0
        %v791 = vadd.f32 %v642, %v790
        %792 = vmatprep.mubr.bf16.mxu0 0
        %793 = vmatmul.mubr.bf16.gmra.mrb[0].mxu0 %v688
        %v794 = vpop.f32.mrb[0].mxu0
        %v795 = vadd.f32 %v638, %v794
        %v796 = vpop.f32.mrb[0].mxu0
        %v797 = vadd.f32 %v642, %v796
        %v798 = vpop.f32.mrb[0].mxu0
        %v799 = vadd.f32 %v638, %v798
        %v800 = vpop.f32.mrb[0].mxu0
        %v801 = vadd.f32 %v642, %v800
        %802 = vdwg.mxu0
        %v803 = vadd.f32 %v725, %v727
        %804 = vadd.xlane.f32.xlu0 %v803
        %v805 = vpop.xlane.xlu0 %804
        %v806 = vadd.f32 %v729, %v731
        %807 = vadd.xlane.f32.xlu0 %v806
        %v808 = vpop.xlane.xlu0 %807
        %v809 = vadd.f32 %v735, %v737
        %810 = vadd.xlane.f32.xlu0 %v809
        %v811 = vpop.xlane.xlu0 %810
        %v812 = vadd.f32 %v739, %v741
        %813 = vadd.xlane.f32.xlu0 %v812
        %v814 = vpop.xlane.xlu0 %813
        %v815 = vadd.f32 %v745, %v747
        %816 = vadd.xlane.f32.xlu0 %v815
        %v817 = vpop.xlane.xlu0 %816
        %v818 = vadd.f32 %v749, %v751
        %819 = vadd.xlane.f32.xlu0 %v818
        %v820 = vpop.xlane.xlu0 %819
        %v821 = vadd.f32 %v755, %v757
        %822 = vadd.xlane.f32.xlu0 %v821
        %v823 = vpop.xlane.xlu0 %822
        %v824 = vadd.f32 %v759, %v761
        %825 = vadd.xlane.f32.xlu0 %v824
        %v826 = vpop.xlane.xlu0 %825
        %v827 = vadd.f32 %v765, %v767
        %828 = vadd.xlane.f32.xlu0 %v827
        %v829 = vpop.xlane.xlu0 %828
        %v830 = vadd.f32 %v769, %v771
        %831 = vadd.xlane.f32.xlu0 %v830
        %v832 = vpop.xlane.xlu0 %831
        %v833 = vadd.f32 %v775, %v777
        %834 = vadd.xlane.f32.xlu0 %v833
        %v835 = vpop.xlane.xlu0 %834
        %v836 = vadd.f32 %v779, %v781
        %837 = vadd.xlane.f32.xlu0 %v836
        %v838 = vpop.xlane.xlu0 %837
        %v839 = vadd.f32 %v785, %v787
        %840 = vadd.xlane.f32.xlu0 %v839
        %v841 = vpop.xlane.xlu0 %840
        %v842 = vadd.f32 %v789, %v791
        %843 = vadd.xlane.f32.xlu0 %v842
        %v844 = vpop.xlane.xlu0 %843
        %v845 = vadd.f32 %v795, %v797
        %846 = vadd.xlane.f32.xlu0 %v845
        %v847 = vpop.xlane.xlu0 %846
        %v848 = vadd.f32 %v799, %v801
        %849 = vadd.xlane.f32.xlu0 %v848
        %v850 = vpop.xlane.xlu0 %849
        %v851 = vrcp.pop 256.0
        %v852 = vmul.f32 %v805, %v851
        %v853 = vmul.f32 %v808, %v851
        %v854 = vmul.f32 %v811, %v851
        %v855 = vmul.f32 %v814, %v851
        %v856 = vmul.f32 %v817, %v851
        %v857 = vmul.f32 %v820, %v851
        %v858 = vmul.f32 %v823, %v851
        %v859 = vmul.f32 %v826, %v851
        %v860 = vmul.f32 %v829, %v851
        %v861 = vmul.f32 %v832, %v851
        %v862 = vmul.f32 %v835, %v851
        %v863 = vmul.f32 %v838, %v851
        %v864 = vmul.f32 %v841, %v851
        %v865 = vmul.f32 %v844, %v851
        %v866 = vmul.f32 %v847, %v851
        %v867 = vmul.f32 %v850, %v851
        %v868 = vmul.f32 %v725, %v725
        %v869 = vmul.f32 %v727, %v727
        %v870 = vmul.f32 %v729, %v729
        %v871 = vmul.f32 %v731, %v731
        %v872 = vmul.f32 %v735, %v735
        %v873 = vmul.f32 %v737, %v737
        %v874 = vmul.f32 %v739, %v739
        %v875 = vmul.f32 %v741, %v741
        %v876 = vmul.f32 %v745, %v745
        %v877 = vmul.f32 %v747, %v747
        %v878 = vmul.f32 %v749, %v749
        %v879 = vmul.f32 %v751, %v751
        %v880 = vmul.f32 %v755, %v755
        %v881 = vmul.f32 %v757, %v757
        %v882 = vmul.f32 %v759, %v759
        %v883 = vmul.f32 %v761, %v761
        %v884 = vmul.f32 %v765, %v765
        %v885 = vmul.f32 %v767, %v767
        %v886 = vmul.f32 %v769, %v769
        %v887 = vmul.f32 %v771, %v771
        %v888 = vmul.f32 %v775, %v775
        %v889 = vmul.f32 %v777, %v777
        %v890 = vmul.f32 %v779, %v779
        %v891 = vmul.f32 %v781, %v781
        %v892 = vmul.f32 %v785, %v785
        %v893 = vmul.f32 %v787, %v787
        %v894 = vmul.f32 %v789, %v789
        %v895 = vmul.f32 %v791, %v791
        %v896 = vmul.f32 %v795, %v795
        %v897 = vmul.f32 %v797, %v797
        %v898 = vmul.f32 %v799, %v799
        %v899 = vmul.f32 %v801, %v801
        %v900 = vadd.f32 %v868, %v869
        %901 = vadd.xlane.f32.xlu0 %v900
        %v902 = vpop.xlane.xlu0 %901
        %v903 = vadd.f32 %v870, %v871
        %904 = vadd.xlane.f32.xlu0 %v903
        %v905 = vpop.xlane.xlu0 %904
        %v906 = vadd.f32 %v872, %v873
        %907 = vadd.xlane.f32.xlu0 %v906
        %v908 = vpop.xlane.xlu0 %907
        %v909 = vadd.f32 %v874, %v875
        %910 = vadd.xlane.f32.xlu0 %v909
        %v911 = vpop.xlane.xlu0 %910
        %v912 = vadd.f32 %v876, %v877
        %913 = vadd.xlane.f32.xlu0 %v912
        %v914 = vpop.xlane.xlu0 %913
        %v915 = vadd.f32 %v878, %v879
        %916 = vadd.xlane.f32.xlu0 %v915
        %v917 = vpop.xlane.xlu0 %916
        %v918 = vadd.f32 %v880, %v881
        %919 = vadd.xlane.f32.xlu0 %v918
        %v920 = vpop.xlane.xlu0 %919
        %v921 = vadd.f32 %v882, %v883
        %922 = vadd.xlane.f32.xlu0 %v921
        %v923 = vpop.xlane.xlu0 %922
        %v924 = vadd.f32 %v884, %v885
        %925 = vadd.xlane.f32.xlu0 %v924
        %v926 = vpop.xlane.xlu0 %925
        %v927 = vadd.f32 %v886, %v887
        %928 = vadd.xlane.f32.xlu0 %v927
        %v929 = vpop.xlane.xlu0 %928
        %v930 = vadd.f32 %v888, %v889
        %931 = vadd.xlane.f32.xlu0 %v930
        %v932 = vpop.xlane.xlu0 %931
        %v933 = vadd.f32 %v890, %v891
        %934 = vadd.xlane.f32.xlu0 %v933
        %v935 = vpop.xlane.xlu0 %934
        %v936 = vadd.f32 %v892, %v893
        %937 = vadd.xlane.f32.xlu0 %v936
        %v938 = vpop.xlane.xlu0 %937
        %v939 = vadd.f32 %v894, %v895
        %940 = vadd.xlane.f32.xlu0 %v939
        %v941 = vpop.xlane.xlu0 %940
        %v942 = vadd.f32 %v896, %v897
        %943 = vadd.xlane.f32.xlu0 %v942
        %v944 = vpop.xlane.xlu0 %943
        %v945 = vadd.f32 %v898, %v899
        %946 = vadd.xlane.f32.xlu0 %v945
        %v947 = vpop.xlane.xlu0 %946
        %v948 = vmul.f32 %v902, %v851
        %v949 = vmul.f32 %v905, %v851
        %v950 = vmul.f32 %v908, %v851
        %v951 = vmul.f32 %v911, %v851
        %v952 = vmul.f32 %v914, %v851
        %v953 = vmul.f32 %v917, %v851
        %v954 = vmul.f32 %v920, %v851
        %v955 = vmul.f32 %v923, %v851
        %v956 = vmul.f32 %v926, %v851
        %v957 = vmul.f32 %v929, %v851
        %v958 = vmul.f32 %v932, %v851
        %v959 = vmul.f32 %v935, %v851
        %v960 = vmul.f32 %v938, %v851
        %v961 = vmul.f32 %v941, %v851
        %v962 = vmul.f32 %v944, %v851
        %v963 = vmul.f32 %v947, %v851
        %v964 = vmul.f32 %v852, %v852
        %v965 = vmul.f32 %v853, %v853
        %v966 = vmul.f32 %v854, %v854
        %v967 = vmul.f32 %v855, %v855
        %v968 = vmul.f32 %v856, %v856
        %v969 = vmul.f32 %v857, %v857
        %v970 = vmul.f32 %v858, %v858
        %v971 = vmul.f32 %v859, %v859
        %v972 = vmul.f32 %v860, %v860
        %v973 = vmul.f32 %v861, %v861
        %v974 = vmul.f32 %v862, %v862
        %v975 = vmul.f32 %v863, %v863
        %v976 = vmul.f32 %v864, %v864
        %v977 = vmul.f32 %v865, %v865
        %v978 = vmul.f32 %v866, %v866
        %v979 = vmul.f32 %v867, %v867
        %v980 = vsub.f32 %v948, %v964
        %v981 = vsub.f32 %v949, %v965
        %v982 = vsub.f32 %v950, %v966
        %v983 = vsub.f32 %v951, %v967
        %v984 = vsub.f32 %v952, %v968
        %v985 = vsub.f32 %v953, %v969
        %v986 = vsub.f32 %v954, %v970
        %v987 = vsub.f32 %v955, %v971
        %v988 = vsub.f32 %v956, %v972
        %v989 = vsub.f32 %v957, %v973
        %v990 = vsub.f32 %v958, %v974
        %v991 = vsub.f32 %v959, %v975
        %v992 = vsub.f32 %v960, %v976
        %v993 = vsub.f32 %v961, %v977
        %v994 = vsub.f32 %v962, %v978
        %v995 = vsub.f32 %v963, %v979
        %v996 = vmax.f32 %v980, 0.0
        %v997 = vmax.f32 %v981, 0.0
        %v998 = vmax.f32 %v982, 0.0
        %v999 = vmax.f32 %v983, 0.0
        %v1000 = vmax.f32 %v984, 0.0
        %v1001 = vmax.f32 %v985, 0.0
        %v1002 = vmax.f32 %v986, 0.0
        %v1003 = vmax.f32 %v987, 0.0
        %v1004 = vmax.f32 %v988, 0.0
        %v1005 = vmax.f32 %v989, 0.0
        %v1006 = vmax.f32 %v990, 0.0
        %v1007 = vmax.f32 %v991, 0.0
        %v1008 = vmax.f32 %v992, 0.0
        %v1009 = vmax.f32 %v993, 0.0
        %v1010 = vmax.f32 %v994, 0.0
        %v1011 = vmax.f32 %v995, 0.0
        %v1012 = vadd.f32 %v996, 1e-05
        %v1013 = vadd.f32 %v997, 1e-05
        %v1014 = vadd.f32 %v998, 1e-05
        %v1015 = vadd.f32 %v999, 1e-05
        %v1016 = vadd.f32 %v1000, 1e-05
        %v1017 = vadd.f32 %v1001, 1e-05
        %v1018 = vadd.f32 %v1002, 1e-05
        %v1019 = vadd.f32 %v1003, 1e-05
        %v1020 = vadd.f32 %v1004, 1e-05
        %v1021 = vadd.f32 %v1005, 1e-05
        %v1022 = vadd.f32 %v1006, 1e-05
        %v1023 = vadd.f32 %v1007, 1e-05
        %v1024 = vadd.f32 %v1008, 1e-05
        %v1025 = vadd.f32 %v1009, 1e-05
        %v1026 = vadd.f32 %v1010, 1e-05
        %v1027 = vadd.f32 %v1011, 1e-05
        %v1028 = vrsqrt.pop %v1012
        %v1029 = vrsqrt.pop %v1013
        %v1030 = vrsqrt.pop %v1014
        %v1031 = vrsqrt.pop %v1015
        %v1032 = vrsqrt.pop %v1016
        %v1033 = vrsqrt.pop %v1017
        %v1034 = vrsqrt.pop %v1018
        %v1035 = vrsqrt.pop %v1019
        %v1036 = vrsqrt.pop %v1020
        %v1037 = vrsqrt.pop %v1021
        %v1038 = vrsqrt.pop %v1022
        %v1039 = vrsqrt.pop %v1023
        %v1040 = vrsqrt.pop %v1024
        %v1041 = vrsqrt.pop %v1025
        %v1042 = vrsqrt.pop %v1026
        %v1043 = vrsqrt.pop %v1027
        %v1045 = vlaneseq
        %v1046 = vshrl.u32 %v1045, 7
        %v1047 = vsub.s32 0, %v1046
        %v1048 = vrot.slane %v363, %v1047
        %v1049 = vlaneseq
        %v1050 = vshrl.u32 %v1049, 7
        %v1051 = vsub.s32 1, %v1050
        %v1052 = vrot.slane %v363, %v1051
        %v1055 = vmul.f32 %v1048, %v1028
        %v1056 = vmul.f32 %v1052, %v1028
        %v1057 = vmul.f32 %v1048, %v1029
        %v1058 = vmul.f32 %v1052, %v1029
        %v1059 = vmul.f32 %v1048, %v1030
        %v1060 = vmul.f32 %v1052, %v1030
        %v1061 = vmul.f32 %v1048, %v1031
        %v1062 = vmul.f32 %v1052, %v1031
        %v1063 = vmul.f32 %v1048, %v1032
        %v1064 = vmul.f32 %v1052, %v1032
        %v1065 = vmul.f32 %v1048, %v1033
        %v1066 = vmul.f32 %v1052, %v1033
        %v1067 = vmul.f32 %v1048, %v1034
        %v1068 = vmul.f32 %v1052, %v1034
        %v1069 = vmul.f32 %v1048, %v1035
        %v1070 = vmul.f32 %v1052, %v1035
        %v1071 = vmul.f32 %v1048, %v1036
        %v1072 = vmul.f32 %v1052, %v1036
        %v1073 = vmul.f32 %v1048, %v1037
        %v1074 = vmul.f32 %v1052, %v1037
        %v1075 = vmul.f32 %v1048, %v1038
        %v1076 = vmul.f32 %v1052, %v1038
        %v1077 = vmul.f32 %v1048, %v1039
        %v1078 = vmul.f32 %v1052, %v1039
        %v1079 = vmul.f32 %v1048, %v1040
        %v1080 = vmul.f32 %v1052, %v1040
        %v1081 = vmul.f32 %v1048, %v1041
        %v1082 = vmul.f32 %v1052, %v1041
        %v1083 = vmul.f32 %v1048, %v1042
        %v1084 = vmul.f32 %v1052, %v1042
        %v1085 = vmul.f32 %v1048, %v1043
        %v1086 = vmul.f32 %v1052, %v1043
        %v1087 = vmul.f32 %v852, %v1055
        %v1088 = vmul.f32 %v852, %v1056
        %v1089 = vmul.f32 %v853, %v1057
        %v1090 = vmul.f32 %v853, %v1058
        %v1091 = vmul.f32 %v854, %v1059
        %v1092 = vmul.f32 %v854, %v1060
        %v1093 = vmul.f32 %v855, %v1061
        %v1094 = vmul.f32 %v855, %v1062
        %v1095 = vmul.f32 %v856, %v1063
        %v1096 = vmul.f32 %v856, %v1064
        %v1097 = vmul.f32 %v857, %v1065
        %v1098 = vmul.f32 %v857, %v1066
        %v1099 = vmul.f32 %v858, %v1067
        %v1100 = vmul.f32 %v858, %v1068
        %v1101 = vmul.f32 %v859, %v1069
        %v1102 = vmul.f32 %v859, %v1070
        %v1103 = vmul.f32 %v860, %v1071
        %v1104 = vmul.f32 %v860, %v1072
        %v1105 = vmul.f32 %v861, %v1073
        %v1106 = vmul.f32 %v861, %v1074
        %v1107 = vmul.f32 %v862, %v1075
        %v1108 = vmul.f32 %v862, %v1076
        %v1109 = vmul.f32 %v863, %v1077
        %v1110 = vmul.f32 %v863, %v1078
        %v1111 = vmul.f32 %v864, %v1079
        %v1112 = vmul.f32 %v864, %v1080
        %v1113 = vmul.f32 %v865, %v1081
        %v1114 = vmul.f32 %v865, %v1082
        %v1115 = vmul.f32 %v866, %v1083
        %v1116 = vmul.f32 %v866, %v1084
        %v1117 = vmul.f32 %v867, %v1085
        %v1118 = vmul.f32 %v867, %v1086
        %v1120 = vlaneseq
        %v1121 = vshrl.u32 %v1120, 7
        %v1122 = vsub.s32 0, %v1121
        %v1123 = vrot.slane %v364, %v1122
        %v1124 = vlaneseq
        %v1125 = vshrl.u32 %v1124, 7
        %v1126 = vsub.s32 1, %v1125
        %v1127 = vrot.slane %v364, %v1126
        %v1130 = vsub.f32 %v1123, %v1087
        %v1131 = vsub.f32 %v1127, %v1088
        %v1132 = vsub.f32 %v1123, %v1089
        %v1133 = vsub.f32 %v1127, %v1090
        %v1134 = vsub.f32 %v1123, %v1091
        %v1135 = vsub.f32 %v1127, %v1092
        %v1136 = vsub.f32 %v1123, %v1093
        %v1137 = vsub.f32 %v1127, %v1094
        %v1138 = vsub.f32 %v1123, %v1095
        %v1139 = vsub.f32 %v1127, %v1096
        %v1140 = vsub.f32 %v1123, %v1097
        %v1141 = vsub.f32 %v1127, %v1098
        %v1142 = vsub.f32 %v1123, %v1099
        %v1143 = vsub.f32 %v1127, %v1100
        %v1144 = vsub.f32 %v1123, %v1101
        %v1145 = vsub.f32 %v1127, %v1102
        %v1146 = vsub.f32 %v1123, %v1103
        %v1147 = vsub.f32 %v1127, %v1104
        %v1148 = vsub.f32 %v1123, %v1105
        %v1149 = vsub.f32 %v1127, %v1106
        %v1150 = vsub.f32 %v1123, %v1107
        %v1151 = vsub.f32 %v1127, %v1108
        %v1152 = vsub.f32 %v1123, %v1109
        %v1153 = vsub.f32 %v1127, %v1110
        %v1154 = vsub.f32 %v1123, %v1111
        %v1155 = vsub.f32 %v1127, %v1112
        %v1156 = vsub.f32 %v1123, %v1113
        %v1157 = vsub.f32 %v1127, %v1114
        %v1158 = vsub.f32 %v1123, %v1115
        %v1159 = vsub.f32 %v1127, %v1116
        %v1160 = vsub.f32 %v1123, %v1117
        %v1161 = vsub.f32 %v1127, %v1118
        %v1162 = vmul.f32 %v725, %v1055
        %v1163 = vmul.f32 %v727, %v1056
        %v1164 = vmul.f32 %v729, %v1057
        %v1165 = vmul.f32 %v731, %v1058
        %v1166 = vmul.f32 %v735, %v1059
        %v1167 = vmul.f32 %v737, %v1060
        %v1168 = vmul.f32 %v739, %v1061
        %v1169 = vmul.f32 %v741, %v1062
        %v1170 = vmul.f32 %v745, %v1063
        %v1171 = vmul.f32 %v747, %v1064
        %v1172 = vmul.f32 %v749, %v1065
        %v1173 = vmul.f32 %v751, %v1066
        %v1174 = vmul.f32 %v755, %v1067
        %v1175 = vmul.f32 %v757, %v1068
        %v1176 = vmul.f32 %v759, %v1069
        %v1177 = vmul.f32 %v761, %v1070
        %v1178 = vmul.f32 %v765, %v1071
        %v1179 = vmul.f32 %v767, %v1072
        %v1180 = vmul.f32 %v769, %v1073
        %v1181 = vmul.f32 %v771, %v1074
        %v1182 = vmul.f32 %v775, %v1075
        %v1183 = vmul.f32 %v777, %v1076
        %v1184 = vmul.f32 %v779, %v1077
        %v1185 = vmul.f32 %v781, %v1078
        %v1186 = vmul.f32 %v785, %v1079
        %v1187 = vmul.f32 %v787, %v1080
        %v1188 = vmul.f32 %v789, %v1081
        %v1189 = vmul.f32 %v791, %v1082
        %v1190 = vmul.f32 %v795, %v1083
        %v1191 = vmul.f32 %v797, %v1084
        %v1192 = vmul.f32 %v799, %v1085
        %v1193 = vmul.f32 %v801, %v1086
        %v1194 = vadd.f32 %v1162, %v1130
        %v1195 = vadd.f32 %v1163, %v1131
        %v1196 = vadd.f32 %v1164, %v1132
        %v1197 = vadd.f32 %v1165, %v1133
        %v1198 = vadd.f32 %v1166, %v1134
        %v1199 = vadd.f32 %v1167, %v1135
        %v1200 = vadd.f32 %v1168, %v1136
        %v1201 = vadd.f32 %v1169, %v1137
        %v1202 = vadd.f32 %v1170, %v1138
        %v1203 = vadd.f32 %v1171, %v1139
        %v1204 = vadd.f32 %v1172, %v1140
        %v1205 = vadd.f32 %v1173, %v1141
        %v1206 = vadd.f32 %v1174, %v1142
        %v1207 = vadd.f32 %v1175, %v1143
        %v1208 = vadd.f32 %v1176, %v1144
        %v1209 = vadd.f32 %v1177, %v1145
        %v1210 = vadd.f32 %v1178, %v1146
        %v1211 = vadd.f32 %v1179, %v1147
        %v1212 = vadd.f32 %v1180, %v1148
        %v1213 = vadd.f32 %v1181, %v1149
        %v1214 = vadd.f32 %v1182, %v1150
        %v1215 = vadd.f32 %v1183, %v1151
        %v1216 = vadd.f32 %v1184, %v1152
        %v1217 = vadd.f32 %v1185, %v1153
        %v1218 = vadd.f32 %v1186, %v1154
        %v1219 = vadd.f32 %v1187, %v1155
        %v1220 = vadd.f32 %v1188, %v1156
        %v1221 = vadd.f32 %v1189, %v1157
        %v1222 = vadd.f32 %v1190, %v1158
        %v1223 = vadd.f32 %v1191, %v1159
        %v1224 = vadd.f32 %v1192, %v1160
        %v1225 = vadd.f32 %v1193, %v1161
        %v1226 = vmax.f32 %v1194, 0.0
        %v1227 = vmax.f32 %v1195, 0.0
        %v1228 = vmax.f32 %v1196, 0.0
        %v1229 = vmax.f32 %v1197, 0.0
        %v1230 = vmax.f32 %v1198, 0.0
        %v1231 = vmax.f32 %v1199, 0.0
        %v1232 = vmax.f32 %v1200, 0.0
        %v1233 = vmax.f32 %v1201, 0.0
        %v1234 = vmax.f32 %v1202, 0.0
        %v1235 = vmax.f32 %v1203, 0.0
        %v1236 = vmax.f32 %v1204, 0.0
        %v1237 = vmax.f32 %v1205, 0.0
        %v1238 = vmax.f32 %v1206, 0.0
        %v1239 = vmax.f32 %v1207, 0.0
        %v1240 = vmax.f32 %v1208, 0.0
        %v1241 = vmax.f32 %v1209, 0.0
        %v1242 = vmax.f32 %v1210, 0.0
        %v1243 = vmax.f32 %v1211, 0.0
        %v1244 = vmax.f32 %v1212, 0.0
        %v1245 = vmax.f32 %v1213, 0.0
        %v1246 = vmax.f32 %v1214, 0.0
        %v1247 = vmax.f32 %v1215, 0.0
        %v1248 = vmax.f32 %v1216, 0.0
        %v1249 = vmax.f32 %v1217, 0.0
        %v1250 = vmax.f32 %v1218, 0.0
        %v1251 = vmax.f32 %v1219, 0.0
        %v1252 = vmax.f32 %v1220, 0.0
        %v1253 = vmax.f32 %v1221, 0.0
        %v1254 = vmax.f32 %v1222, 0.0
        %v1255 = vmax.f32 %v1223, 0.0
        %v1256 = vmax.f32 %v1224, 0.0
        %v1257 = vmax.f32 %v1225, 0.0
        %v1258 = vpack.c.bf16 %v1228, %v1226
        %v1259 = vpack.c.bf16 %v1229, %v1227
        %v1260 = vpack.c.bf16 %v1232, %v1230
        %v1261 = vpack.c.bf16 %v1233, %v1231
        %v1262 = vpack.c.bf16 %v1236, %v1234
        %v1263 = vpack.c.bf16 %v1237, %v1235
        %v1264 = vpack.c.bf16 %v1240, %v1238
        %v1265 = vpack.c.bf16 %v1241, %v1239
        %v1266 = vpack.c.bf16 %v1244, %v1242
        %v1267 = vpack.c.bf16 %v1245, %v1243
        %v1268 = vpack.c.bf16 %v1248, %v1246
        %v1269 = vpack.c.bf16 %v1249, %v1247
        %v1270 = vpack.c.bf16 %v1252, %v1250
        %v1271 = vpack.c.bf16 %v1253, %v1251
        %v1272 = vpack.c.bf16 %v1256, %v1254
        %v1273 = vpack.c.bf16 %v1257, %v1255
        %v1274 = vld [vmem:[%s6] sm:$0xf]
        %v1275 = vld [vmem:[%s6 + $0x4] sm:$0xf]
        %v1276 = vld [vmem:[%s6 + $0x8] sm:$0xf]
        %v1277 = vld [vmem:[%s6 + $0xc] sm:$0xf]
        %v1278 = vld [vmem:[%s6 + $0x10] sm:$0xf]
        %v1279 = vld [vmem:[%s6 + $0x14] sm:$0xf]
        %v1280 = vld [vmem:[%s6 + $0x18] sm:$0xf]
        %v1281 = vld [vmem:[%s6 + $0x1c] sm:$0xf]
        %v1282 = vld [vmem:[%s6 + $0x20] sm:$0xf]
        %v1283 = vld [vmem:[%s6 + $0x24] sm:$0xf]
        %v1284 = vld [vmem:[%s6 + $0x28] sm:$0xf]
        %v1285 = vld [vmem:[%s6 + $0x2c] sm:$0xf]
        %v1286 = vld [vmem:[%s6 + $0x30] sm:$0xf]
        %v1287 = vld [vmem:[%s6 + $0x34] sm:$0xf]
        %v1288 = vld [vmem:[%s6 + $0x38] sm:$0xf]
        %v1289 = vld [vmem:[%s6 + $0x3c] sm:$0xf]
        %v1290 = vld [vmem:[%s6 + $0x40] sm:$0xf]
        %v1291 = vld [vmem:[%s6 + $0x44] sm:$0xf]
        %v1292 = vld [vmem:[%s6 + $0x48] sm:$0xf]
        %v1293 = vld [vmem:[%s6 + $0x4c] sm:$0xf]
        %v1294 = vld [vmem:[%s6 + $0x50] sm:$0xf]
        %v1295 = vld [vmem:[%s6 + $0x54] sm:$0xf]
        %v1296 = vld [vmem:[%s6 + $0x58] sm:$0xf]
        %v1297 = vld [vmem:[%s6 + $0x5c] sm:$0xf]
        %v1298 = vld [vmem:[%s6 + $0x60] sm:$0xf]
        %v1299 = vld [vmem:[%s6 + $0x64] sm:$0xf]
        %v1300 = vld [vmem:[%s6 + $0x68] sm:$0xf]
        %v1301 = vld [vmem:[%s6 + $0x6c] sm:$0xf]
        %v1302 = vld [vmem:[%s6 + $0x70] sm:$0xf]
        %v1303 = vld [vmem:[%s6 + $0x74] sm:$0xf]
        %v1304 = vld [vmem:[%s6 + $0x78] sm:$0xf]
        %v1305 = vld [vmem:[%s6 + $0x7c] sm:$0xf]
        %v1307 = vlaneseq
        %v1308 = vshrl.u32 %v1307, 7
        %v1309 = vsub.s32 0, %v1308
        %v1310 = vrot.slane %v365, %v1309
        %v1344 = vunpack.c.l.b16 %v1274
        %v1345 = vunpack.c.l.b16 %v1275
        %v1346 = vunpack.c.l.b16 %v1276
        %v1347 = vunpack.c.l.b16 %v1277
        %v1348 = vunpack.c.l.b16 %v1278
        %v1349 = vunpack.c.l.b16 %v1279
        %v1350 = vunpack.c.l.b16 %v1280
        %v1351 = vunpack.c.l.b16 %v1281
        %v1352 = vunpack.c.l.b16 %v1282
        %v1353 = vunpack.c.l.b16 %v1283
        %v1354 = vunpack.c.l.b16 %v1284
        %v1355 = vunpack.c.l.b16 %v1285
        %v1356 = vunpack.c.l.b16 %v1286
        %v1357 = vunpack.c.l.b16 %v1287
        %v1358 = vunpack.c.l.b16 %v1288
        %v1359 = vunpack.c.l.b16 %v1289
        %v1360 = vunpack.c.l.b16 %v1290
        %v1361 = vunpack.c.l.b16 %v1291
        %v1362 = vunpack.c.l.b16 %v1292
        %v1363 = vunpack.c.l.b16 %v1293
        %v1364 = vunpack.c.l.b16 %v1294
        %v1365 = vunpack.c.l.b16 %v1295
        %v1366 = vunpack.c.l.b16 %v1296
        %v1367 = vunpack.c.l.b16 %v1297
        %v1368 = vunpack.c.l.b16 %v1298
        %v1369 = vunpack.c.l.b16 %v1299
        %v1370 = vunpack.c.l.b16 %v1300
        %v1371 = vunpack.c.l.b16 %v1301
        %v1372 = vunpack.c.l.b16 %v1302
        %v1373 = vunpack.c.l.b16 %v1303
        %v1374 = vunpack.c.l.b16 %v1304
        %v1375 = vunpack.c.l.b16 %v1305
        %v1376 = vpack.c.b16 %v1345, %v1344
        %v1377 = vpack.c.b16 %v1347, %v1346
        %v1378 = vpack.c.b16 %v1349, %v1348
        %v1379 = vpack.c.b16 %v1351, %v1350
        %v1380 = vpack.c.b16 %v1353, %v1352
        %v1381 = vpack.c.b16 %v1355, %v1354
        %v1382 = vpack.c.b16 %v1357, %v1356
        %v1383 = vpack.c.b16 %v1359, %v1358
        %v1384 = vpack.c.b16 %v1361, %v1360
        %v1385 = vpack.c.b16 %v1363, %v1362
        %v1386 = vpack.c.b16 %v1365, %v1364
        %v1387 = vpack.c.b16 %v1367, %v1366
        %v1388 = vpack.c.b16 %v1369, %v1368
        %v1389 = vpack.c.b16 %v1371, %v1370
        %v1390 = vpack.c.b16 %v1373, %v1372
        %v1391 = vpack.c.b16 %v1375, %v1374
        %1408 = vmatprep.subr.bf16.mxu0 0
        %1409 = vmatpush1.bf16.msra.mxu0 %v1376
        %1410 = vmatprep.subr.bf16.mxu0 0
        %1411 = vmatpush1.bf16.msra.mxu0 %v1377
        %1412 = vmatprep.subr.bf16.mxu0 0
        %1413 = vmatpush1.bf16.msra.mxu0 %v1378
        %1414 = vmatprep.subr.bf16.mxu0 0
        %1415 = vmatpush1.bf16.msra.mxu0 %v1379
        %1416 = vmatprep.subr.bf16.mxu0 0
        %1417 = vmatpush1.bf16.msra.mxu0 %v1380
        %1418 = vmatprep.subr.bf16.mxu0 0
        %1419 = vmatpush1.bf16.msra.mxu0 %v1381
        %1420 = vmatprep.subr.bf16.mxu0 0
        %1421 = vmatpush1.bf16.msra.mxu0 %v1382
        %1422 = vmatprep.subr.bf16.mxu0 0
        %1423 = vmatpush1.bf16.msra.mxu0 %v1383
        %1424 = vmatprep.subr.bf16.mxu0 0
        %1425 = vmatpush1.bf16.msra.mxu0 %v1384
        %1426 = vmatprep.subr.bf16.mxu0 0
        %1427 = vmatpush1.bf16.msra.mxu0 %v1385
        %1428 = vmatprep.subr.bf16.mxu0 0
        %1429 = vmatpush1.bf16.msra.mxu0 %v1386
        %1430 = vmatprep.subr.bf16.mxu0 0
        %1431 = vmatpush1.bf16.msra.mxu0 %v1387
        %1432 = vmatprep.subr.bf16.mxu0 0
        %1433 = vmatpush1.bf16.msra.mxu0 %v1388
        %1434 = vmatprep.subr.bf16.mxu0 0
        %1435 = vmatpush1.bf16.msra.mxu0 %v1389
        %1436 = vmatprep.subr.bf16.mxu0 0
        %1437 = vmatpush1.bf16.msra.mxu0 %v1390
        %1438 = vmatprep.subr.bf16.mxu0 0
        %1439 = vmatpush1.bf16.msra.mxu0 %v1391
        %1440 = vmatprep.mubr.bf16.mxu0 %v1259
        %1441 = vmatmul.mubr.bf16.gmra.mrb[0].mxu0 %v1258
        %v1442 = vpop.f32.mrb[0].mxu0
        %v1443 = vadd.f32 %v1310, %v1442
        %v1444 = vpop.f32.mrb[0].mxu0
        %v1445 = vpop.f32.mrb[0].mxu0
        %v1446 = vadd.f32 %v1310, %v1445
        %v1447 = vpop.f32.mrb[0].mxu0
        %1448 = vmatprep.mubr.bf16.mxu0 %v1261
        %1449 = vmatmul.mubr.bf16.gmra.mrb[0].mxu0 %v1260
        %v1450 = vpop.f32.mrb[0].mxu0
        %v1451 = vadd.f32 %v1310, %v1450
        %v1452 = vpop.f32.mrb[0].mxu0
        %v1453 = vpop.f32.mrb[0].mxu0
        %v1454 = vadd.f32 %v1310, %v1453
        %v1455 = vpop.f32.mrb[0].mxu0
        %1456 = vmatprep.mubr.bf16.mxu0 %v1263
        %1457 = vmatmul.mubr.bf16.gmra.mrb[0].mxu0 %v1262
        %v1458 = vpop.f32.mrb[0].mxu0
        %v1459 = vadd.f32 %v1310, %v1458
        %v1460 = vpop.f32.mrb[0].mxu0
        %v1461 = vpop.f32.mrb[0].mxu0
        %v1462 = vadd.f32 %v1310, %v1461
        %v1463 = vpop.f32.mrb[0].mxu0
        %1464 = vmatprep.mubr.bf16.mxu0 %v1265
        %1465 = vmatmul.mubr.bf16.gmra.mrb[0].mxu0 %v1264
        %v1466 = vpop.f32.mrb[0].mxu0
        %v1467 = vadd.f32 %v1310, %v1466
        %v1468 = vpop.f32.mrb[0].mxu0
        %v1469 = vpop.f32.mrb[0].mxu0
        %v1470 = vadd.f32 %v1310, %v1469
        %v1471 = vpop.f32.mrb[0].mxu0
        %1472 = vmatprep.mubr.bf16.mxu0 %v1267
        %1473 = vmatmul.mubr.bf16.gmra.mrb[0].mxu0 %v1266
        %v1474 = vpop.f32.mrb[0].mxu0
        %v1475 = vadd.f32 %v1310, %v1474
        %v1476 = vpop.f32.mrb[0].mxu0
        %v1477 = vpop.f32.mrb[0].mxu0
        %v1478 = vadd.f32 %v1310, %v1477
        %v1479 = vpop.f32.mrb[0].mxu0
        %1480 = vmatprep.mubr.bf16.mxu0 %v1269
        %1481 = vmatmul.mubr.bf16.gmra.mrb[0].mxu0 %v1268
        %v1482 = vpop.f32.mrb[0].mxu0
        %v1483 = vadd.f32 %v1310, %v1482
        %v1484 = vpop.f32.mrb[0].mxu0
        %v1485 = vpop.f32.mrb[0].mxu0
        %v1486 = vadd.f32 %v1310, %v1485
        %v1487 = vpop.f32.mrb[0].mxu0
        %1488 = vmatprep.mubr.bf16.mxu0 %v1271
        %1489 = vmatmul.mubr.bf16.gmra.mrb[0].mxu0 %v1270
        %v1490 = vpop.f32.mrb[0].mxu0
        %v1491 = vadd.f32 %v1310, %v1490
        %v1492 = vpop.f32.mrb[0].mxu0
        %v1493 = vpop.f32.mrb[0].mxu0
        %v1494 = vadd.f32 %v1310, %v1493
        %v1495 = vpop.f32.mrb[0].mxu0
        %1496 = vmatprep.mubr.bf16.mxu0 %v1273
        %1497 = vmatmul.mubr.bf16.gmra.mrb[0].mxu0 %v1272
        %v1498 = vpop.f32.mrb[0].mxu0
        %v1499 = vadd.f32 %v1310, %v1498
        %v1500 = vpop.f32.mrb[0].mxu0
        %v1501 = vpop.f32.mrb[0].mxu0
        %v1502 = vadd.f32 %v1310, %v1501
        %v1503 = vpop.f32.mrb[0].mxu0
        %1504 = vdwg.mxu0
        %1505 = vmax.xlane.f32.xlu0 %v1443
        %v1506 = vpop.xlane.xlu0 %1505
        %1507 = vmax.xlane.f32.xlu0 %v1446
        %v1508 = vpop.xlane.xlu0 %1507
        %1509 = vmax.xlane.f32.xlu0 %v1451
        %v1510 = vpop.xlane.xlu0 %1509
        %1511 = vmax.xlane.f32.xlu0 %v1454
        %v1512 = vpop.xlane.xlu0 %1511
        %1513 = vmax.xlane.f32.xlu0 %v1459
        %v1514 = vpop.xlane.xlu0 %1513
        %1515 = vmax.xlane.f32.xlu0 %v1462
        %v1516 = vpop.xlane.xlu0 %1515
        %1517 = vmax.xlane.f32.xlu0 %v1467
        %v1518 = vpop.xlane.xlu0 %1517
        %1519 = vmax.xlane.f32.xlu0 %v1470
        %v1520 = vpop.xlane.xlu0 %1519
        %1521 = vmax.xlane.f32.xlu0 %v1475
        %v1522 = vpop.xlane.xlu0 %1521
        %1523 = vmax.xlane.f32.xlu0 %v1478
        %v1524 = vpop.xlane.xlu0 %1523
        %1525 = vmax.xlane.f32.xlu0 %v1483
        %v1526 = vpop.xlane.xlu0 %1525
        %1527 = vmax.xlane.f32.xlu0 %v1486
        %v1528 = vpop.xlane.xlu0 %1527
        %1529 = vmax.xlane.f32.xlu0 %v1491
        %v1530 = vpop.xlane.xlu0 %1529
        %1531 = vmax.xlane.f32.xlu0 %v1494
        %v1532 = vpop.xlane.xlu0 %1531
        %1533 = vmax.xlane.f32.xlu0 %v1499
        %v1534 = vpop.xlane.xlu0 %1533
        %1535 = vmax.xlane.f32.xlu0 %v1502
        %v1536 = vpop.xlane.xlu0 %1535
        %v1537 = vsub.f32 %v1443, %v1506
        %v1538 = vsub.f32 %v1446, %v1508
        %v1539 = vsub.f32 %v1451, %v1510
        %v1540 = vsub.f32 %v1454, %v1512
        %v1541 = vsub.f32 %v1459, %v1514
        %v1542 = vsub.f32 %v1462, %v1516
        %v1543 = vsub.f32 %v1467, %v1518
        %v1544 = vsub.f32 %v1470, %v1520
        %v1545 = vsub.f32 %v1475, %v1522
        %v1546 = vsub.f32 %v1478, %v1524
        %v1547 = vsub.f32 %v1483, %v1526
        %v1548 = vsub.f32 %v1486, %v1528
        %v1549 = vsub.f32 %v1491, %v1530
        %v1550 = vsub.f32 %v1494, %v1532
        %v1551 = vsub.f32 %v1499, %v1534
        %v1552 = vsub.f32 %v1502, %v1536
        %v1553 = vmul.f32 %v1537, 1.442695
        %v1554 = vpow.pop %v1553
        %v1555 = vmul.f32 %v1538, 1.442695
        %v1556 = vpow.pop %v1555
        %v1557 = vmul.f32 %v1539, 1.442695
        %v1558 = vpow.pop %v1557
        %v1559 = vmul.f32 %v1540, 1.442695
        %v1560 = vpow.pop %v1559
        %v1561 = vmul.f32 %v1541, 1.442695
        %v1562 = vpow.pop %v1561
        %v1563 = vmul.f32 %v1542, 1.442695
        %v1564 = vpow.pop %v1563
        %v1565 = vmul.f32 %v1543, 1.442695
        %v1566 = vpow.pop %v1565
        %v1567 = vmul.f32 %v1544, 1.442695
        %v1568 = vpow.pop %v1567
        %v1569 = vmul.f32 %v1545, 1.442695
        %v1570 = vpow.pop %v1569
        %v1571 = vmul.f32 %v1546, 1.442695
        %v1572 = vpow.pop %v1571
        %v1573 = vmul.f32 %v1547, 1.442695
        %v1574 = vpow.pop %v1573
        %v1575 = vmul.f32 %v1548, 1.442695
        %v1576 = vpow.pop %v1575
        %v1577 = vmul.f32 %v1549, 1.442695
        %v1578 = vpow.pop %v1577
        %v1579 = vmul.f32 %v1550, 1.442695
        %v1580 = vpow.pop %v1579
        %v1581 = vmul.f32 %v1551, 1.442695
        %v1582 = vpow.pop %v1581
        %v1583 = vmul.f32 %v1552, 1.442695
        %v1584 = vpow.pop %v1583
        %1585 = vadd.xlane.f32.xlu0 %v1554
        %v1586 = vpop.xlane.xlu0 %1585
        %1587 = vadd.xlane.f32.xlu0 %v1556
        %v1588 = vpop.xlane.xlu0 %1587
        %1589 = vadd.xlane.f32.xlu0 %v1558
        %v1590 = vpop.xlane.xlu0 %1589
        %1591 = vadd.xlane.f32.xlu0 %v1560
        %v1592 = vpop.xlane.xlu0 %1591
        %1593 = vadd.xlane.f32.xlu0 %v1562
        %v1594 = vpop.xlane.xlu0 %1593
        %1595 = vadd.xlane.f32.xlu0 %v1564
        %v1596 = vpop.xlane.xlu0 %1595
        %1597 = vadd.xlane.f32.xlu0 %v1566
        %v1598 = vpop.xlane.xlu0 %1597
        %1599 = vadd.xlane.f32.xlu0 %v1568
        %v1600 = vpop.xlane.xlu0 %1599
        %1601 = vadd.xlane.f32.xlu0 %v1570
        %v1602 = vpop.xlane.xlu0 %1601
        %1603 = vadd.xlane.f32.xlu0 %v1572
        %v1604 = vpop.xlane.xlu0 %1603
        %1605 = vadd.xlane.f32.xlu0 %v1574
        %v1606 = vpop.xlane.xlu0 %1605
        %1607 = vadd.xlane.f32.xlu0 %v1576
        %v1608 = vpop.xlane.xlu0 %1607
        %1609 = vadd.xlane.f32.xlu0 %v1578
        %v1610 = vpop.xlane.xlu0 %1609
        %1611 = vadd.xlane.f32.xlu0 %v1580
        %v1612 = vpop.xlane.xlu0 %1611
        %1613 = vadd.xlane.f32.xlu0 %v1582
        %v1614 = vpop.xlane.xlu0 %1613
        %1615 = vadd.xlane.f32.xlu0 %v1584
        %v1616 = vpop.xlane.xlu0 %1615
        %v1617 = vrcp.pop %v1586
        %v1618 = vrcp.pop %v1588
        %v1619 = vrcp.pop %v1590
        %v1620 = vrcp.pop %v1592
        %v1621 = vrcp.pop %v1594
        %v1622 = vrcp.pop %v1596
        %v1623 = vrcp.pop %v1598
        %v1624 = vrcp.pop %v1600
        %v1625 = vrcp.pop %v1602
        %v1626 = vrcp.pop %v1604
        %v1627 = vrcp.pop %v1606
        %v1628 = vrcp.pop %v1608
        %v1629 = vrcp.pop %v1610
        %v1630 = vrcp.pop %v1612
        %v1631 = vrcp.pop %v1614
        %v1632 = vrcp.pop %v1616
        %v1633 = vmul.f32 %v1554, %v1617
        %v1634 = vmul.f32 %v1556, %v1618
        %v1635 = vmul.f32 %v1558, %v1619
        %v1636 = vmul.f32 %v1560, %v1620
        %v1637 = vmul.f32 %v1562, %v1621
        %v1638 = vmul.f32 %v1564, %v1622
        %v1639 = vmul.f32 %v1566, %v1623
        %v1640 = vmul.f32 %v1568, %v1624
        %v1641 = vmul.f32 %v1570, %v1625
        %v1642 = vmul.f32 %v1572, %v1626
        %v1643 = vmul.f32 %v1574, %v1627
        %v1644 = vmul.f32 %v1576, %v1628
        %v1645 = vmul.f32 %v1578, %v1629
        %v1646 = vmul.f32 %v1580, %v1630
        %v1647 = vmul.f32 %v1582, %v1631
        %v1648 = vmul.f32 %v1584, %v1632
        %1649 = vst [vmem:[%s315] sm:$0xff] %v1633
        %1650 = vst [vmem:[%s315 + $0x8] sm:$0xff] %v1634
        %1651 = vst [vmem:[%s315 + $0x10] sm:$0xff] %v1635
        %1652 = vst [vmem:[%s315 + $0x18] sm:$0xff] %v1636
        %1653 = vst [vmem:[%s315 + $0x20] sm:$0xff] %v1637
        %1654 = vst [vmem:[%s315 + $0x28] sm:$0xff] %v1638
        %1655 = vst [vmem:[%s315 + $0x30] sm:$0xff] %v1639
        %1656 = vst [vmem:[%s315 + $0x38] sm:$0xff] %v1640
        %1657 = vst [vmem:[%s315 + $0x40] sm:$0xff] %v1641
        %1658 = vst [vmem:[%s315 + $0x48] sm:$0xff] %v1642
        %1659 = vst [vmem:[%s315 + $0x50] sm:$0xff] %v1643
        %1660 = vst [vmem:[%s315 + $0x58] sm:$0xff] %v1644
        %1661 = vst [vmem:[%s315 + $0x60] sm:$0xff] %v1645
        %1662 = vst [vmem:[%s315 + $0x68] sm:$0xff] %v1646
        %1663 = vst [vmem:[%s315 + $0x70] sm:$0xff] %v1647
        %1664 = vst [vmem:[%s315 + $0x78] sm:$0xff] %v1648
        %s1665 = sand.u32 %s208, 1
        %s1666 = scalar_lea.sflag [#allocation3], %s1665
        %s1667 = sand.u32 %s208, 1
        %s1668 = smul.addr %s1667, 128
        %s1669 = scalar_lea.vmem [#allocation2], %s1668
        // Predicated region
        $region53: #{tpu_custom_call.1} parent=51 // pred_check
          %p1670 = pneg %p218
        $region54: #{tpu_custom_call.1} parent=51 // pred_check_branch
          %1672 = sbr.rel (%p1670) target = $region56
        $region55: #{tpu_custom_call.1} parent=51 // pred_region
          %s1673 = smul.u32 16, %s22
          %s1675 = ssub.s32 2048, 2048
          %1676 = vsyncadd %s1666, %s1675
          %s1677 = smul.addr %s1673, 128
          %s1678 = scalar_lea.hbm %s8, %s1677
          %s1679 = sshll.u32 %s1669, 4
          %s1680 = int_to_ptr.vmem [resolvable:$true] %s1679
          %1685 = dma.vmem_to_hbm [thread:$0]  %s1680, 2048, %s1678, %s1666, 128, 128, 8
        $region56: #{tpu_custom_call.1} parent=51 // pred_fallthru
          _
      $region52: #{tpu_custom_call.1} parent=5 // pred_fallthru
        _
      %p1686 = scmp.le.s32.totalorder 2, %s17
      // Predicated region
      $region57: #{tpu_custom_call.1} parent=5 // pred_check
        %p1687 = pneg %p1686
      $region58: #{tpu_custom_call.1} parent=5 // pred_check_branch
        %1689 = sbr.rel (%p1687) target = $region60
      $region59: #{tpu_custom_call.1} parent=5 // pred_region
        %s1690 = ssub.s32 %s17, 2
        // Predicated region
        $region61: #{tpu_custom_call.1} parent=59 // pred_check
          %p1691 = pneg %p224
        $region62: #{tpu_custom_call.1} parent=59 // pred_check_branch
          %1693 = sbr.rel (%p1691) target = $region64
        $region63: #{tpu_custom_call.1} parent=59 // pred_region
          %s1694 = sand.u32 %s209, 1
          %s1695 = scalar_lea.sflag [#allocation3], %s1694
          %s1696 = sand.u32 %s209, 1
          %s1697 = smul.addr %s1696, 128
          %s1698 = scalar_lea.vmem [#allocation2], %s1697
          %1699 = dma.done %s1695, 2048
        $region64: #{tpu_custom_call.1} parent=59 // pred_fallthru
          _
      $region60: #{tpu_custom_call.1} parent=5 // pred_fallthru
        _
    $region6: #{tpu_custom_call.1} parent=1 // loop_footer
      %s21 = sadd.s32 1, %s17
    $region7: #{tpu_custom_call.1} parent=1 // loop_footer_branch
      %16 = sbr.rel target = $region3
    $region8: #{tpu_custom_call.1} parent=1 // loop_exit
      _
    %1700 = vsyncpa [#allocation3], 1
    %s1701 = scalar_lea.sflag [#allocation3], 1
    %1702 = vsyncpa %s1701, 1

</llo_original>
